<compile_context>
chip_gen: v7x
topology: tpu7x:2x2x1
jax: 0.10.0
libtpu: 0.0.40
codegen_flags: <defaults>
</compile_context>

<pallas_src>
import functools
import math

import jax
import jax.numpy as jnp
from jax import lax
from jax.experimental import pallas as pl
from jax.experimental.pallas import tpu as pltpu

# ---------------- config (small, consistent with the module) ----------------
B = 2            # batch
N = 8            # sequence length (tokens)
C = 32           # embedding dim
NUM_HEADS = 4
HEAD_DIM = C // NUM_HEADS
MLP_RATIO = 4.0
HIDDEN = int(C * MLP_RATIO)          # 128
SCALE = HEAD_DIM ** (-0.5)
EPS = 1e-5                            # torch nn.LayerNorm default


def _layer_norm(x, gamma, beta):
    mu = jnp.mean(x, axis=-1, keepdims=True)
    var = jnp.mean((x - mu) ** 2, axis=-1, keepdims=True)   # biased, like torch
    return (x - mu) * lax.rsqrt(var + EPS) * gamma + beta


def _gelu_exact(x):
    # torch nn.GELU default = exact erf formulation
    return 0.5 * x * (1.0 + lax.erf(x * (1.0 / math.sqrt(2.0))))


def _bmm(a, b):
    # (G, n, k) @ (G, k, m) -> (G, n, m), batched over the leading dim.
    return lax.dot_general(a, b, (((2,), (1,)), ((0,), (0,))),
                           preferred_element_type=jnp.float32)


def _bmm_nt(a, b):
    # (G, n, k) @ (G, m, k)^T -> (G, n, m), batched over the leading dim.
    return lax.dot_general(a, b, (((2,), (2,)), ((0,), (0,))),
                           preferred_element_type=jnp.float32)


def block_kernel(x_ref,
                 g1_ref, b1_ref,          # norm1 gamma/beta          (1, C)
                 wqkv_ref,                # per-head qkv weight (bb*H, C, 3*d)
                 wproj_ref, bproj_ref,    # per-head proj (bb*H, d, C), (1, C)
                 g2_ref, b2_ref,          # norm2 gamma/beta          (1, C)
                 w1_ref, bb1_ref,         # fc1 (bb, C, HIDDEN), (1, HIDDEN)
                 w2_ref, bb2_ref,         # fc2 (bb, HIDDEN, C), (1, C)
                 o_ref, *, bb):
    x = x_ref[...].astype(jnp.float32)                        # (bb, N, C)

    # ---------------- attention branch ----------------
    xn = _layer_norm(x, g1_ref[...], b1_ref[...])             # (bb, N, C)

    # heads as a leading batch dim: (bb*H, N, C) x (bb*H, C, 3d) -> (bb*H, N, 3d)
    xn_b = jnp.broadcast_to(xn[:, None, :, :], (bb, NUM_HEADS, N, C))
    xn_b = xn_b.reshape(bb * NUM_HEADS, N, C)                 # leading-dim merge only
    qkv = _bmm(xn_b, wqkv_ref[...])                           # (bb*H, N, 3d)
    q = qkv[:, :, :HEAD_DIM]
    k = qkv[:, :, HEAD_DIM:2 * HEAD_DIM]
    v = qkv[:, :, 2 * HEAD_DIM:]

    s = _bmm_nt(q, k) * SCALE                                 # (bb*H, N, N)
    s = s - jnp.max(s, axis=-1, keepdims=True)
    p = jnp.exp(s)
    p = p * pl.reciprocal(jnp.sum(p, axis=-1, keepdims=True), approx=True)
    o = _bmm(p, v)                                            # (bb*H, N, d)

    # output projection: per-head partial projections, summed over heads
    # (identical to concat(heads) @ Wproj^T, without any lane concatenate).
    proj_h = _bmm(o, wproj_ref[...])                          # (bb*H, N, C)
    proj4 = proj_h.reshape(bb, NUM_HEADS, N, C)               # leading-dim split only
    proj = proj4[:, 0]
    for h in range(1, NUM_HEADS):                             # pure VPU adds
        proj = proj + proj4[:, h]
    proj = proj + bproj_ref[...]
    x1 = x + proj                                             # residual 1

    # ---------------- MLP branch ----------------
    xn2 = _layer_norm(x1, g2_ref[...], b2_ref[...])           # (bb, N, C)
    h1 = _bmm(xn2, w1_ref[...]) + bb1_ref[...]                # (bb, N, HIDDEN)
    h1 = _gelu_exact(h1)
    h2 = _bmm(h1, w2_ref[...]) + bb2_ref[...]                 # (bb, N, C)

    o_ref[...] = (x1 + h2).astype(o_ref.dtype)                # residual 2


def _single_tensorcore_chip():
    """True for 1-TensorCore chips (v5e / v6e) where the B-grid is pure overhead."""
    try:
        kind = jax.devices()[0].device_kind.lower()
    except Exception:
        return False
    return ("lite" in kind) or ("v5e" in kind) or ("v6e" in kind)


def vit_block(x, params):
    """x: (B, N, C) float32. params: torch-layout weights, pre-transposed (see main)."""
    B_, N_, C_ = x.shape

    # Generation-specific batching: fuse B into one grid step on single-TC chips,
    # keep a 2-wide parallel grid on multi-TC chips (v7x) so both cores get work.
    bb = B_ if _single_tensorcore_chip() else 1
    grid_b = B_ // bb

    # ---- weight re-layout (plain JAX, outside the kernel) ----
    # per-head qkv weight: (H, C, 3*d), output lanes ordered [q | k | v] per head
    wqkv_h = params["wqkv_t"].reshape(C_, 3, NUM_HEADS, HEAD_DIM)
    wqkv_h = jnp.transpose(wqkv_h, (2, 0, 1, 3)).reshape(NUM_HEADS, C_, 3 * HEAD_DIM)
    wqkv_b = jnp.tile(wqkv_h, (bb, 1, 1))                         # (bb*H, C, 3d)
    wproj_b = jnp.tile(params["wproj_t"].reshape(NUM_HEADS, HEAD_DIM, C_),
                       (bb, 1, 1))                                # (bb*H, d, C)
    w1_b = jnp.tile(params["w1_t"][None], (bb, 1, 1))             # (bb, C, HIDDEN)
    w2_b = jnp.tile(params["w2_t"][None], (bb, 1, 1))             # (bb, HIDDEN, C)

    def full(shape):
        zero = tuple(0 for _ in shape)
        return pl.BlockSpec(shape, lambda i, _z=zero: _z)

    in_specs = [
        pl.BlockSpec((bb, N_, C_), lambda i: (i, 0, 0)),   # x
        full((1, C_)), full((1, C_)),                      # norm1
        full(wqkv_b.shape),                                # qkv per-head
        full(wproj_b.shape), full((1, C_)),                # proj per-head, bias
        full((1, C_)), full((1, C_)),                      # norm2
        full(w1_b.shape), full((1, HIDDEN)),               # fc1, bias
        full(w2_b.shape), full((1, C_)),                   # fc2, bias
    ]
    out_spec = pl.BlockSpec((bb, N_, C_), lambda i: (i, 0, 0))

    kern = functools.partial(block_kernel, bb=bb)
    return pl.pallas_call(
        kern,
        out_shape=jax.ShapeDtypeStruct((B_, N_, C_), x.dtype),
        grid_spec=pltpu.PrefetchScalarGridSpec(
            num_scalar_prefetch=0,
            grid=(grid_b,),
            in_specs=in_specs,
            out_specs=out_spec,
        ),
        compiler_params=pltpu.CompilerParams(
            dimension_semantics=("parallel",)),
    )(x,
      params["g1"], params["b1"],
      wqkv_b,
      wproj_b, params["bproj"],
      params["g2"], params["b2"],
      w1_b, params["bb1"],
      w2_b, params["bb2"])


# ---------------- pure-JAX reference (mirrors the torch forward) ----------------
def vit_block_ref(x, params):
    xn = _layer_norm(x, params["g1"], params["b1"])
    qkv = xn @ params["wqkv_t"]                                   # (B, N, 3C)
    qkv = qkv.reshape(B, N, 3, NUM_HEADS, HEAD_DIM).transpose(2, 0, 3, 1, 4)
    q, k, v = qkv[0], qkv[1], qkv[2]                              # (B, H, N, hd)
    attn = jnp.einsum("bhnd,bhmd->bhnm", q, k) * SCALE
    attn = jax.nn.softmax(attn, axis=-1)
    ao = jnp.einsum("bhnm,bhmd->bhnd", attn, v)
    ao = ao.transpose(0, 2, 1, 3).reshape(B, N, C)
    x1 = x + (ao @ params["wproj_t"] + params["bproj"])
    xn2 = _layer_norm(x1, params["g2"], params["b2"])
    h1 = _gelu_exact(xn2 @ params["w1_t"] + params["bb1"])
    return x1 + (h1 @ params["w2_t"] + params["bb2"])


if __name__ == "__main__":
    key = jax.random.PRNGKey(0)
    ks = jax.random.split(key, 8)

    x = jax.random.normal(ks[0], (B, N, C), dtype=jnp.float32)

    # deterministic parameter init (torch layout: Linear weight is (out, in));
    # we store the transposed (in, out) versions; the wrapper builds the
    # per-head / batched layouts the kernel consumes.
    wqkv = 0.05 * jax.random.normal(ks[1], (3 * C, C), jnp.float32)
    wproj = 0.05 * jax.random.normal(ks[2], (C, C), jnp.float32)
    bproj = 0.01 * jax.random.normal(ks[3], (C,), jnp.float32)
    w1 = 0.05 * jax.random.normal(ks[4], (HIDDEN, C), jnp.float32)
    bb1 = 0.01 * jax.random.normal(ks[5], (HIDDEN,), jnp.float32)
    w2 = 0.05 * jax.random.normal(ks[6], (C, HIDDEN), jnp.float32)
    bb2 = 0.01 * jax.random.normal(ks[7], (C,), jnp.float32)

    params = dict(
        g1=jnp.ones((1, C), jnp.float32), b1=jnp.zeros((1, C), jnp.float32),
        wqkv_t=wqkv.T,
        wproj_t=wproj.T, bproj=bproj.reshape(1, C),
        g2=jnp.ones((1, C), jnp.float32), b2=jnp.zeros((1, C), jnp.float32),
        w1_t=w1.T, bb1=bb1.reshape(1, HIDDEN),
        w2_t=w2.T, bb2=bb2.reshape(1, C),
    )

    out = jax.block_until_ready(vit_block(x, params))
    ref = jax.block_until_ready(vit_block_ref(x, params))

    assert out.shape == (B, N, C)
    # tolerance slightly looser than f32 exact because the softmax denominator
    # uses the approximate EUP reciprocal (pl.reciprocal(approx=True)).
    err = jnp.max(jnp.abs(out - ref))
    assert jnp.allclose(out, ref, atol=2e-3, rtol=2e-3), f"max err {err}"
    print("KERNEL_OK")
</pallas_src>

<mosaic_0001>
module attributes {stable_mosaic.version = 11 : i64} {
  func.func @block_kernel(%arg0: i32, %arg1: memref<1x8x32xf32, #tpu.memory_space<vmem>>, %arg2: memref<1x32xf32, #tpu.memory_space<vmem>>, %arg3: memref<1x32xf32, #tpu.memory_space<vmem>>, %arg4: memref<4x32x24xf32, #tpu.memory_space<vmem>>, %arg5: memref<4x8x32xf32, #tpu.memory_space<vmem>>, %arg6: memref<1x32xf32, #tpu.memory_space<vmem>>, %arg7: memref<1x32xf32, #tpu.memory_space<vmem>>, %arg8: memref<1x32xf32, #tpu.memory_space<vmem>>, %arg9: memref<1x32x128xf32, #tpu.memory_space<vmem>>, %arg10: memref<1x128xf32, #tpu.memory_space<vmem>>, %arg11: memref<1x128x32xf32, #tpu.memory_space<vmem>>, %arg12: memref<1x32xf32, #tpu.memory_space<vmem>>, %arg13: memref<1x8x32xf32, #tpu.memory_space<vmem>>) attributes {dimension_semantics = [#tpu.dimension_semantics<parallel>], iteration_bounds = array<i64: 2>, scalar_prefetch = 0 : i64, scratch_operands = 0 : i64, tpu.core_type = #tpu.core_type<tc>, window_params = [{transform_indices = @transform_0, window_bounds = array<i64: 1, 8, 32>}, {pipeline_mode = #tpu.pipeline_mode<synchronous>, transform_indices = @transform_1, window_bounds = array<i64: 1, 32>}, {pipeline_mode = #tpu.pipeline_mode<synchronous>, transform_indices = @transform_2, window_bounds = array<i64: 1, 32>}, {pipeline_mode = #tpu.pipeline_mode<synchronous>, transform_indices = @transform_3, window_bounds = array<i64: 4, 32, 24>}, {pipeline_mode = #tpu.pipeline_mode<synchronous>, transform_indices = @transform_4, window_bounds = array<i64: 4, 8, 32>}, {pipeline_mode = #tpu.pipeline_mode<synchronous>, transform_indices = @transform_5, window_bounds = array<i64: 1, 32>}, {pipeline_mode = #tpu.pipeline_mode<synchronous>, transform_indices = @transform_6, window_bounds = array<i64: 1, 32>}, {pipeline_mode = #tpu.pipeline_mode<synchronous>, transform_indices = @transform_7, window_bounds = array<i64: 1, 32>}, {pipeline_mode = #tpu.pipeline_mode<synchronous>, transform_indices = @transform_8, window_bounds = array<i64: 1, 32, 128>}, {pipeline_mode = #tpu.pipeline_mode<synchronous>, transform_indices = @transform_9, window_bounds = array<i64: 1, 128>}, {pipeline_mode = #tpu.pipeline_mode<synchronous>, transform_indices = @transform_10, window_bounds = array<i64: 1, 128, 32>}, {pipeline_mode = #tpu.pipeline_mode<synchronous>, transform_indices = @transform_11, window_bounds = array<i64: 1, 32>}, {transform_indices = @transform_12, window_bounds = array<i64: 1, 8, 32>}]} {
    %c0 = arith.constant 0 : index
    %c0_0 = arith.constant 0 : index
    %c0_1 = arith.constant 0 : index
    %0 = vector.load %arg1[%c0, %c0_0, %c0_1] : memref<1x8x32xf32, #tpu.memory_space<vmem>>, vector<1x8x32xf32>
    %c0_2 = arith.constant 0 : index
    %c0_3 = arith.constant 0 : index
    %1 = vector.load %arg2[%c0_2, %c0_3] : memref<1x32xf32, #tpu.memory_space<vmem>>, vector<1x32xf32>
    %c0_4 = arith.constant 0 : index
    %c0_5 = arith.constant 0 : index
    %2 = vector.load %arg3[%c0_4, %c0_5] : memref<1x32xf32, #tpu.memory_space<vmem>>, vector<1x32xf32>
    %cst = arith.constant dense<0.000000e+00> : vector<1x8xf32>
    %3 = vector.multi_reduction <add>, %0, %cst [2] : vector<1x8x32xf32> to vector<1x8xf32>
    %4 = vector.shape_cast %3 : vector<1x8xf32> to vector<1x8x1xf32>
    %cst_6 = arith.constant 3.200000e+01 : f32
    %5 = vector.broadcast %cst_6 : f32 to vector<1x8x1xf32>
    %6 = arith.divf %4, %5 : vector<1x8x1xf32>
    %7 = vector.broadcast %6 : vector<1x8x1xf32> to vector<1x8x32xf32>
    %8 = arith.subf %0, %7 : vector<1x8x32xf32>
    %9 = arith.mulf %8, %8 : vector<1x8x32xf32>
    %cst_7 = arith.constant dense<0.000000e+00> : vector<1x8xf32>
    %10 = vector.multi_reduction <add>, %9, %cst_7 [2] : vector<1x8x32xf32> to vector<1x8xf32>
    %11 = vector.shape_cast %10 : vector<1x8xf32> to vector<1x8x1xf32>
    %cst_8 = arith.constant 3.200000e+01 : f32
    %12 = vector.broadcast %cst_8 : f32 to vector<1x8x1xf32>
    %13 = arith.divf %11, %12 : vector<1x8x1xf32>
    %14 = vector.broadcast %6 : vector<1x8x1xf32> to vector<1x8x32xf32>
    %15 = arith.subf %0, %14 : vector<1x8x32xf32>
    %cst_9 = arith.constant 9.99999974E-6 : f32
    %16 = vector.broadcast %cst_9 : f32 to vector<1x8x1xf32>
    %17 = arith.addf %13, %16 : vector<1x8x1xf32>
    %18 = math.rsqrt %17 : vector<1x8x1xf32>
    %19 = vector.broadcast %18 : vector<1x8x1xf32> to vector<1x8x32xf32>
    %20 = arith.mulf %15, %19 : vector<1x8x32xf32>
    %21 = vector.shape_cast %1 : vector<1x32xf32> to vector<1x1x32xf32>
    %22 = vector.broadcast %21 : vector<1x1x32xf32> to vector<1x8x32xf32>
    %23 = arith.mulf %20, %22 : vector<1x8x32xf32>
    %24 = vector.shape_cast %2 : vector<1x32xf32> to vector<1x1x32xf32>
    %25 = vector.broadcast %24 : vector<1x1x32xf32> to vector<1x8x32xf32>
    %26 = arith.addf %23, %25 : vector<1x8x32xf32>
    %27 = vector.shape_cast %26 : vector<1x8x32xf32> to vector<1x1x8x32xf32>
    %28 = vector.shape_cast %27 : vector<1x1x8x32xf32> to vector<1x1x8x32xf32>
    %29 = vector.broadcast %28 : vector<1x1x8x32xf32> to vector<1x4x8x32xf32>
    %30 = vector.shape_cast %29 : vector<1x4x8x32xf32> to vector<4x8x32xf32>
    %c0_10 = arith.constant 0 : index
    %c0_11 = arith.constant 0 : index
    %c0_12 = arith.constant 0 : index
    %31 = vector.load %arg4[%c0_10, %c0_11, %c0_12] : memref<4x32x24xf32, #tpu.memory_space<vmem>>, vector<4x32x24xf32>
    %cst_13 = arith.constant dense<0.000000e+00> : vector<4x8x24xf32>
    %32 = tpu.matmul %30, %31, %cst_13 {dimension_numbers = #tpu.dot_dimension_numbers<[2], [1], [1], [2], [0, 0, 0, 1, 1, 2], [0], [0]>} : vector<4x8x32xf32>, vector<4x32x24xf32>, vector<4x8x24xf32> -> vector<4x8x24xf32>
    %33 = vector.extract_strided_slice %32 {offsets = [0, 0, 0], sizes = [4, 8, 8], strides = [1, 1, 1]} : vector<4x8x24xf32> to vector<4x8x8xf32>
    %34 = vector.extract_strided_slice %32 {offsets = [0, 0, 8], sizes = [4, 8, 8], strides = [1, 1, 1]} : vector<4x8x24xf32> to vector<4x8x8xf32>
    %35 = vector.extract_strided_slice %32 {offsets = [0, 0, 16], sizes = [4, 8, 8], strides = [1, 1, 1]} : vector<4x8x24xf32> to vector<4x8x8xf32>
    %cst_14 = arith.constant dense<0.000000e+00> : vector<4x8x8xf32>
    %36 = tpu.matmul %33, %34, %cst_14 {dimension_numbers = #tpu.dot_dimension_numbers<[2], [2], [1], [1], [0, 0, 0, 1, 1, 1], [0], [0]>} : vector<4x8x8xf32>, vector<4x8x8xf32>, vector<4x8x8xf32> -> vector<4x8x8xf32>
    %cst_15 = arith.constant 0.353553385 : f32
    %37 = vector.broadcast %cst_15 : f32 to vector<4x8x8xf32>
    %38 = arith.mulf %36, %37 : vector<4x8x8xf32>
    %cst_16 = arith.constant dense<0xFF800000> : vector<4x8xf32>
    %39 = vector.multi_reduction <maximumf>, %38, %cst_16 [2] : vector<4x8x8xf32> to vector<4x8xf32>
    %40 = vector.shape_cast %39 : vector<4x8xf32> to vector<4x8x1xf32>
    %41 = vector.broadcast %40 : vector<4x8x1xf32> to vector<4x8x8xf32>
    %42 = arith.subf %38, %41 : vector<4x8x8xf32>
    %43 = math.exp %42 : vector<4x8x8xf32>
    %cst_17 = arith.constant dense<0.000000e+00> : vector<4x8xf32>
    %44 = vector.multi_reduction <add>, %43, %cst_17 [2] : vector<4x8x8xf32> to vector<4x8xf32>
    %45 = vector.shape_cast %44 : vector<4x8xf32> to vector<4x8x1xf32>
    %46 = tpu.reciprocal %45 {approx = true} : vector<4x8x1xf32> -> vector<4x8x1xf32>
    %47 = vector.broadcast %46 : vector<4x8x1xf32> to vector<4x8x8xf32>
    %48 = arith.mulf %43, %47 : vector<4x8x8xf32>
    %cst_18 = arith.constant dense<0.000000e+00> : vector<4x8x8xf32>
    %49 = tpu.matmul %48, %35, %cst_18 {dimension_numbers = #tpu.dot_dimension_numbers<[2], [1], [1], [2], [0, 0, 0, 1, 1, 2], [0], [0]>} : vector<4x8x8xf32>, vector<4x8x8xf32>, vector<4x8x8xf32> -> vector<4x8x8xf32>
    %c0_19 = arith.constant 0 : index
    %c0_20 = arith.constant 0 : index
    %c0_21 = arith.constant 0 : index
    %50 = vector.load %arg5[%c0_19, %c0_20, %c0_21] : memref<4x8x32xf32, #tpu.memory_space<vmem>>, vector<4x8x32xf32>
    %cst_22 = arith.constant dense<0.000000e+00> : vector<4x8x32xf32>
    %51 = tpu.matmul %49, %50, %cst_22 {dimension_numbers = #tpu.dot_dimension_numbers<[2], [1], [1], [2], [0, 0, 0, 1, 1, 2], [0], [0]>} : vector<4x8x8xf32>, vector<4x8x32xf32>, vector<4x8x32xf32> -> vector<4x8x32xf32>
    %52 = vector.shape_cast %51 : vector<4x8x32xf32> to vector<1x4x8x32xf32>
    %53 = vector.extract_strided_slice %52 {offsets = [0, 0, 0, 0], sizes = [1, 1, 8, 32], strides = [1, 1, 1, 1]} : vector<1x4x8x32xf32> to vector<1x1x8x32xf32>
    %54 = vector.shape_cast %53 : vector<1x1x8x32xf32> to vector<1x8x32xf32>
    %55 = vector.extract_strided_slice %52 {offsets = [0, 1, 0, 0], sizes = [1, 1, 8, 32], strides = [1, 1, 1, 1]} : vector<1x4x8x32xf32> to vector<1x1x8x32xf32>
    %56 = vector.shape_cast %55 : vector<1x1x8x32xf32> to vector<1x8x32xf32>
    %57 = arith.addf %54, %56 : vector<1x8x32xf32>
    %58 = vector.extract_strided_slice %52 {offsets = [0, 2, 0, 0], sizes = [1, 1, 8, 32], strides = [1, 1, 1, 1]} : vector<1x4x8x32xf32> to vector<1x1x8x32xf32>
    %59 = vector.shape_cast %58 : vector<1x1x8x32xf32> to vector<1x8x32xf32>
    %60 = arith.addf %57, %59 : vector<1x8x32xf32>
    %61 = vector.extract_strided_slice %52 {offsets = [0, 3, 0, 0], sizes = [1, 1, 8, 32], strides = [1, 1, 1, 1]} : vector<1x4x8x32xf32> to vector<1x1x8x32xf32>
    %62 = vector.shape_cast %61 : vector<1x1x8x32xf32> to vector<1x8x32xf32>
    %63 = arith.addf %60, %62 : vector<1x8x32xf32>
    %c0_23 = arith.constant 0 : index
    %c0_24 = arith.constant 0 : index
    %64 = vector.load %arg6[%c0_23, %c0_24] : memref<1x32xf32, #tpu.memory_space<vmem>>, vector<1x32xf32>
    %65 = vector.shape_cast %64 : vector<1x32xf32> to vector<1x1x32xf32>
    %66 = vector.broadcast %65 : vector<1x1x32xf32> to vector<1x8x32xf32>
    %67 = arith.addf %63, %66 : vector<1x8x32xf32>
    %68 = arith.addf %0, %67 : vector<1x8x32xf32>
    %c0_25 = arith.constant 0 : index
    %c0_26 = arith.constant 0 : index
    %69 = vector.load %arg7[%c0_25, %c0_26] : memref<1x32xf32, #tpu.memory_space<vmem>>, vector<1x32xf32>
    %c0_27 = arith.constant 0 : index
    %c0_28 = arith.constant 0 : index
    %70 = vector.load %arg8[%c0_27, %c0_28] : memref<1x32xf32, #tpu.memory_space<vmem>>, vector<1x32xf32>
    %cst_29 = arith.constant dense<0.000000e+00> : vector<1x8xf32>
    %71 = vector.multi_reduction <add>, %68, %cst_29 [2] : vector<1x8x32xf32> to vector<1x8xf32>
    %72 = vector.shape_cast %71 : vector<1x8xf32> to vector<1x8x1xf32>
    %cst_30 = arith.constant 3.200000e+01 : f32
    %73 = vector.broadcast %cst_30 : f32 to vector<1x8x1xf32>
    %74 = arith.divf %72, %73 : vector<1x8x1xf32>
    %75 = vector.broadcast %74 : vector<1x8x1xf32> to vector<1x8x32xf32>
    %76 = arith.subf %68, %75 : vector<1x8x32xf32>
    %77 = arith.mulf %76, %76 : vector<1x8x32xf32>
    %cst_31 = arith.constant dense<0.000000e+00> : vector<1x8xf32>
    %78 = vector.multi_reduction <add>, %77, %cst_31 [2] : vector<1x8x32xf32> to vector<1x8xf32>
    %79 = vector.shape_cast %78 : vector<1x8xf32> to vector<1x8x1xf32>
    %cst_32 = arith.constant 3.200000e+01 : f32
    %80 = vector.broadcast %cst_32 : f32 to vector<1x8x1xf32>
    %81 = arith.divf %79, %80 : vector<1x8x1xf32>
    %82 = vector.broadcast %74 : vector<1x8x1xf32> to vector<1x8x32xf32>
    %83 = arith.subf %68, %82 : vector<1x8x32xf32>
    %cst_33 = arith.constant 9.99999974E-6 : f32
    %84 = vector.broadcast %cst_33 : f32 to vector<1x8x1xf32>
    %85 = arith.addf %81, %84 : vector<1x8x1xf32>
    %86 = math.rsqrt %85 : vector<1x8x1xf32>
    %87 = vector.broadcast %86 : vector<1x8x1xf32> to vector<1x8x32xf32>
    %88 = arith.mulf %83, %87 : vector<1x8x32xf32>
    %89 = vector.shape_cast %69 : vector<1x32xf32> to vector<1x1x32xf32>
    %90 = vector.broadcast %89 : vector<1x1x32xf32> to vector<1x8x32xf32>
    %91 = arith.mulf %88, %90 : vector<1x8x32xf32>
    %92 = vector.shape_cast %70 : vector<1x32xf32> to vector<1x1x32xf32>
    %93 = vector.broadcast %92 : vector<1x1x32xf32> to vector<1x8x32xf32>
    %94 = arith.addf %91, %93 : vector<1x8x32xf32>
    %c0_34 = arith.constant 0 : index
    %c0_35 = arith.constant 0 : index
    %c0_36 = arith.constant 0 : index
    %95 = vector.load %arg9[%c0_34, %c0_35, %c0_36] : memref<1x32x128xf32, #tpu.memory_space<vmem>>, vector<1x32x128xf32>
    %cst_37 = arith.constant dense<0.000000e+00> : vector<1x8x128xf32>
    %96 = tpu.matmul %94, %95, %cst_37 {dimension_numbers = #tpu.dot_dimension_numbers<[2], [1], [1], [2], [0, 0, 0, 1, 1, 2], [0], [0]>} : vector<1x8x32xf32>, vector<1x32x128xf32>, vector<1x8x128xf32> -> vector<1x8x128xf32>
    %c0_38 = arith.constant 0 : index
    %c0_39 = arith.constant 0 : index
    %97 = vector.load %arg10[%c0_38, %c0_39] : memref<1x128xf32, #tpu.memory_space<vmem>>, vector<1x128xf32>
    %98 = vector.shape_cast %97 : vector<1x128xf32> to vector<1x1x128xf32>
    %99 = vector.broadcast %98 : vector<1x1x128xf32> to vector<1x8x128xf32>
    %100 = arith.addf %96, %99 : vector<1x8x128xf32>
    %cst_40 = arith.constant 5.000000e-01 : f32
    %101 = vector.broadcast %cst_40 : f32 to vector<1x8x128xf32>
    %102 = arith.mulf %101, %100 : vector<1x8x128xf32>
    %cst_41 = arith.constant 0.707106769 : f32
    %103 = vector.broadcast %cst_41 : f32 to vector<1x8x128xf32>
    %104 = arith.mulf %100, %103 : vector<1x8x128xf32>
    %105 = math.erf %104 : vector<1x8x128xf32>
    %cst_42 = arith.constant 1.000000e+00 : f32
    %106 = vector.broadcast %cst_42 : f32 to vector<1x8x128xf32>
    %107 = arith.addf %106, %105 : vector<1x8x128xf32>
    %108 = arith.mulf %102, %107 : vector<1x8x128xf32>
    %c0_43 = arith.constant 0 : index
    %c0_44 = arith.constant 0 : index
    %c0_45 = arith.constant 0 : index
    %109 = vector.load %arg11[%c0_43, %c0_44, %c0_45] : memref<1x128x32xf32, #tpu.memory_space<vmem>>, vector<1x128x32xf32>
    %cst_46 = arith.constant dense<0.000000e+00> : vector<1x8x32xf32>
    %110 = tpu.matmul %108, %109, %cst_46 {dimension_numbers = #tpu.dot_dimension_numbers<[2], [1], [1], [2], [0, 0, 0, 1, 1, 2], [0], [0]>} : vector<1x8x128xf32>, vector<1x128x32xf32>, vector<1x8x32xf32> -> vector<1x8x32xf32>
    %c0_47 = arith.constant 0 : index
    %c0_48 = arith.constant 0 : index
    %111 = vector.load %arg12[%c0_47, %c0_48] : memref<1x32xf32, #tpu.memory_space<vmem>>, vector<1x32xf32>
    %112 = vector.shape_cast %111 : vector<1x32xf32> to vector<1x1x32xf32>
    %113 = vector.broadcast %112 : vector<1x1x32xf32> to vector<1x8x32xf32>
    %114 = arith.addf %110, %113 : vector<1x8x32xf32>
    %115 = arith.addf %68, %114 : vector<1x8x32xf32>
    %c0_49 = arith.constant 0 : index
    %c0_50 = arith.constant 0 : index
    %c0_51 = arith.constant 0 : index
    %116 = vector.load %arg13[%c0_49, %c0_50, %c0_51] : memref<1x8x32xf32, #tpu.memory_space<vmem>>, vector<1x8x32xf32>
    tpu.vector_store %arg13[%c0_49, %c0_50, %c0_51], %115 {strides = array<i32>} : memref<1x8x32xf32, #tpu.memory_space<vmem>>, vector<1x8x32xf32>,
    return
  }
  func.func @transform_0(%arg0: i32) -> (i32, i32, i32) {
    %c0_i32 = arith.constant 0 : i32
    %c0_i32_0 = arith.constant 0 : i32
    %c0_i32_1 = arith.constant 0 : i32
    return %arg0, %c0_i32, %c0_i32_0 : i32, i32, i32
  }
  func.func @transform_1(%arg0: i32) -> (i32, i32) {
    %c0_i32 = arith.constant 0 : i32
    %c0_i32_0 = arith.constant 0 : i32
    %c0_i32_1 = arith.constant 0 : i32
    return %c0_i32, %c0_i32_0 : i32, i32
  }
  func.func @transform_2(%arg0: i32) -> (i32, i32) {
    %c0_i32 = arith.constant 0 : i32
    %c0_i32_0 = arith.constant 0 : i32
    %c0_i32_1 = arith.constant 0 : i32
    return %c0_i32, %c0_i32_0 : i32, i32
  }
  func.func @transform_3(%arg0: i32) -> (i32, i32, i32) {
    %c0_i32 = arith.constant 0 : i32
    %c0_i32_0 = arith.constant 0 : i32
    %c0_i32_1 = arith.constant 0 : i32
    %c0_i32_2 = arith.constant 0 : i32
    return %c0_i32, %c0_i32_0, %c0_i32_1 : i32, i32, i32
  }
  func.func @transform_4(%arg0: i32) -> (i32, i32, i32) {
    %c0_i32 = arith.constant 0 : i32
    %c0_i32_0 = arith.constant 0 : i32
    %c0_i32_1 = arith.constant 0 : i32
    %c0_i32_2 = arith.constant 0 : i32
    return %c0_i32, %c0_i32_0, %c0_i32_1 : i32, i32, i32
  }
  func.func @transform_5(%arg0: i32) -> (i32, i32) {
    %c0_i32 = arith.constant 0 : i32
    %c0_i32_0 = arith.constant 0 : i32
    %c0_i32_1 = arith.constant 0 : i32
    return %c0_i32, %c0_i32_0 : i32, i32
  }
  func.func @transform_6(%arg0: i32) -> (i32, i32) {
    %c0_i32 = arith.constant 0 : i32
    %c0_i32_0 = arith.constant 0 : i32
    %c0_i32_1 = arith.constant 0 : i32
    return %c0_i32, %c0_i32_0 : i32, i32
  }
  func.func @transform_7(%arg0: i32) -> (i32, i32) {
    %c0_i32 = arith.constant 0 : i32
    %c0_i32_0 = arith.constant 0 : i32
    %c0_i32_1 = arith.constant 0 : i32
    return %c0_i32, %c0_i32_0 : i32, i32
  }
  func.func @transform_8(%arg0: i32) -> (i32, i32, i32) {
    %c0_i32 = arith.constant 0 : i32
    %c0_i32_0 = arith.constant 0 : i32
    %c0_i32_1 = arith.constant 0 : i32
    %c0_i32_2 = arith.constant 0 : i32
    return %c0_i32, %c0_i32_0, %c0_i32_1 : i32, i32, i32
  }
  func.func @transform_9(%arg0: i32) -> (i32, i32) {
    %c0_i32 = arith.constant 0 : i32
    %c0_i32_0 = arith.constant 0 : i32
    %c0_i32_1 = arith.constant 0 : i32
    return %c0_i32, %c0_i32_0 : i32, i32
  }
  func.func @transform_10(%arg0: i32) -> (i32, i32, i32) {
    %c0_i32 = arith.constant 0 : i32
    %c0_i32_0 = arith.constant 0 : i32
    %c0_i32_1 = arith.constant 0 : i32
    %c0_i32_2 = arith.constant 0 : i32
    return %c0_i32, %c0_i32_0, %c0_i32_1 : i32, i32, i32
  }
  func.func @transform_11(%arg0: i32) -> (i32, i32) {
    %c0_i32 = arith.constant 0 : i32
    %c0_i32_0 = arith.constant 0 : i32
    %c0_i32_1 = arith.constant 0 : i32
    return %c0_i32, %c0_i32_0 : i32, i32
  }
  func.func @transform_12(%arg0: i32) -> (i32, i32, i32) {
    %c0_i32 = arith.constant 0 : i32
    %c0_i32_0 = arith.constant 0 : i32
    %c0_i32_1 = arith.constant 0 : i32
    return %arg0, %c0_i32, %c0_i32_0 : i32, i32, i32
  }
}

</mosaic_0001>

<llo_original>
// kernel: tpu_custom_call.1
$region0: #{tpu_custom_call.1}
  #allocation0 [shape = 'u32[]', space=smem, size = 0x4, offset = 0x4, fixed_abs, tag = 'smem constant byte address 0x4 - core index']
  #allocation1 [shape = 'u32[144,128]{1,0:T(1,128)}', space=vmem, size = 0x12000, scoped, tag = 'internal scratch']
  %s0 = inlined_call_operand.vmem [shape: f32[2,8,32], index: 0, kind: input, shape index: {}]
  %s1 = inlined_call_operand.vmem [shape: f32[1,32], index: 1, kind: input, shape index: {}]
  %s2 = inlined_call_operand.vmem [shape: f32[1,32], index: 2, kind: input, shape index: {}]
  %s3 = inlined_call_operand.vmem [shape: f32[4,32,24], index: 3, kind: input, shape index: {}]
  %s4 = inlined_call_operand.vmem [shape: f32[4,8,32], index: 4, kind: input, shape index: {}]
  %s5 = inlined_call_operand.vmem [shape: f32[1,32], index: 5, kind: input, shape index: {}]
  %s6 = inlined_call_operand.vmem [shape: f32[1,32], index: 6, kind: input, shape index: {}]
  %s7 = inlined_call_operand.vmem [shape: f32[1,32], index: 7, kind: input, shape index: {}]
  %s8 = inlined_call_operand.vmem [shape: f32[1,32,128], index: 8, kind: input, shape index: {}]
  %s9 = inlined_call_operand.vmem [shape: f32[1,128], index: 9, kind: input, shape index: {}]
  %s10 = inlined_call_operand.vmem [shape: f32[1,128,32], index: 10, kind: input, shape index: {}]
  %s11 = inlined_call_operand.vmem [shape: f32[1,32], index: 11, kind: input, shape index: {}]
  %s12 = inlined_call_operand.hbm [shape: f32[2,8,32], index: 12, kind: output, shape index: {}]
  %s13 = sld [smem:[#allocation0]]
  $region81: #{tpu_custom_call.1} parent=0
    _
  %s15 = ssub.s32 1, %s13
  %s16 = scalar_select 0, %s15, %s13
  $region1: #{tpu_custom_call.1} parent=0
    #allocation2 [shape = 'u8[8192]{0}', space=vmem, size = 0x2000, scoped, tag = 'output window, operand 0']
    #allocation3 [shape = 's32[2]{0}', space=sflag, size = 0x8, scoped, tag = 'scoped memory for tpu_custom_call.1']
    %17 = vsyncpa [#allocation3], 0
    %s18 = scalar_lea.sflag [#allocation3], 1
    %19 = vsyncpa %s18, 0
    loop: start=0, step=1, limit=4
    $region2: #{tpu_custom_call.1} parent=1 // loop_pre_header
      _
    $region3: #{tpu_custom_call.1} parent=1 // loop_header
      %s21 = sphi 0, %s25
      %p22 = scmp.ge.s32.totalorder %s21, 4
      %s31 = sphi 0, %s33
      %s34 = sphi 0, %s31
      %s35 = sphi 0, %s34
      %s51 = sphi 0, %s35
      %s55 = sphi 0, %s55
      %s57 = sphi 0, %s55
      %s58 = sphi 0, %s57
      %s72 = sphi 0, %s58
      %s76 = sphi 0, %s76
      %s78 = sphi 0, %s76
      %s79 = sphi 0, %s78
      %s93 = sphi 0, %s79
      %s97 = sphi 0, %s97
      %s99 = sphi 0, %s97
      %s100 = sphi 0, %s99
      %s114 = sphi 0, %s100
      %s118 = sphi 0, %s118
      %s120 = sphi 0, %s118
      %s121 = sphi 0, %s120
      %s135 = sphi 0, %s121
      %s139 = sphi 0, %s139
      %s141 = sphi 0, %s139
      %s142 = sphi 0, %s141
      %s156 = sphi 0, %s142
      %s160 = sphi 0, %s160
      %s162 = sphi 0, %s160
      %s163 = sphi 0, %s162
      %s177 = sphi 0, %s163
      %s181 = sphi 0, %s181
      %s183 = sphi 0, %s181
      %s184 = sphi 0, %s183
      %s198 = sphi 0, %s184
      %s202 = sphi 0, %s202
      %s204 = sphi 0, %s202
      %s205 = sphi 0, %s204
      %s219 = sphi 0, %s205
      %s223 = sphi 0, %s223
      %s225 = sphi 0, %s223
      %s226 = sphi 0, %s225
      %s240 = sphi 0, %s226
      %s244 = sphi 0, %s244
      %s246 = sphi 0, %s244
      %s247 = sphi 0, %s246
      %s261 = sphi 0, %s247
      %s265 = sphi 0, %s265
      %s267 = sphi 0, %s265
      %s268 = sphi 0, %s267
      %s282 = sphi 0, %s268
      %s288 = sphi 0, %s290
      %s291 = sphi 0, %s288
      %s292 = sphi 0, %s291
      %s308 = sphi 0, %s292
    $region4: #{tpu_custom_call.1} parent=1 // loop_header_branch
      %24 = sbr.rel (%p22) target = $region8
    $region5: #{tpu_custom_call.1} parent=1 // loop_body
      %s26 = ssub.s32 %s21, 1
      %s27 = ssub.s32 %s21, 2
      %s28 = sadd.s32 %s21, 1
      %s29 = ssub.s32 %s21, %s28
      %p30 = scmp.eq.s32.totalorder %s29, 0
      %s32 = sadd.s32 %s31, 1
      %s33 = scalar_select %p30, %s31, %s32
      %p36 = pneg %p30
      %p37 = scmp.eq.s32.totalorder %s21, 1
      %p38 = por %p36, %p37
      %p39 = scmp.ne.s32.totalorder %s31, %s34
      %p40 = scmp.eq.s32.totalorder %s21, 0
      %p41 = por %p39, %p40
      %p42 = scmp.ne.s32.totalorder %s31, %s34
      %p43 = scmp.eq.s32.totalorder %s26, 1
      %p44 = por %p42, %p43
      %p45 = scmp.ne.s32.totalorder %s34, %s35
      %p46 = scmp.eq.s32.totalorder %s26, 0
      %p47 = por %p45, %p46
      %p48 = scmp.ne.s32.totalorder %s34, %s35
      %p49 = scmp.eq.s32.totalorder %s27, 1
      %p50 = por %p48, %p49
      %p52 = scmp.ne.s32.totalorder %s35, %s51
      %p53 = scmp.eq.s32.totalorder %s27, 0
      %p54 = por %p52, %p53
      %s56 = sadd.s32 %s55, 1
      %p59 = scmp.eq.s32.totalorder %s21, 1
      %p60 = scmp.ne.s32.totalorder %s55, %s57
      %p61 = scmp.eq.s32.totalorder %s21, 0
      %p62 = por %p60, %p61
      %p63 = scmp.ne.s32.totalorder %s55, %s57
      %p64 = scmp.eq.s32.totalorder %s26, 1
      %p65 = por %p63, %p64
      %p66 = scmp.ne.s32.totalorder %s57, %s58
      %p67 = scmp.eq.s32.totalorder %s26, 0
      %p68 = por %p66, %p67
      %p69 = scmp.ne.s32.totalorder %s57, %s58
      %p70 = scmp.eq.s32.totalorder %s27, 1
      %p71 = por %p69, %p70
      %p73 = scmp.ne.s32.totalorder %s58, %s72
      %p74 = scmp.eq.s32.totalorder %s27, 0
      %p75 = por %p73, %p74
      %s77 = sadd.s32 %s76, 1
      %p80 = scmp.eq.s32.totalorder %s21, 1
      %p81 = scmp.ne.s32.totalorder %s76, %s78
      %p82 = scmp.eq.s32.totalorder %s21, 0
      %p83 = por %p81, %p82
      %p84 = scmp.ne.s32.totalorder %s76, %s78
      %p85 = scmp.eq.s32.totalorder %s26, 1
      %p86 = por %p84, %p85
      %p87 = scmp.ne.s32.totalorder %s78, %s79
      %p88 = scmp.eq.s32.totalorder %s26, 0
      %p89 = por %p87, %p88
      %p90 = scmp.ne.s32.totalorder %s78, %s79
      %p91 = scmp.eq.s32.totalorder %s27, 1
      %p92 = por %p90, %p91
      %p94 = scmp.ne.s32.totalorder %s79, %s93
      %p95 = scmp.eq.s32.totalorder %s27, 0
      %p96 = por %p94, %p95
      %s98 = sadd.s32 %s97, 1
      %p101 = scmp.eq.s32.totalorder %s21, 1
      %p102 = scmp.ne.s32.totalorder %s97, %s99
      %p103 = scmp.eq.s32.totalorder %s21, 0
      %p104 = por %p102, %p103
      %p105 = scmp.ne.s32.totalorder %s97, %s99
      %p106 = scmp.eq.s32.totalorder %s26, 1
      %p107 = por %p105, %p106
      %p108 = scmp.ne.s32.totalorder %s99, %s100
      %p109 = scmp.eq.s32.totalorder %s26, 0
      %p110 = por %p108, %p109
      %p111 = scmp.ne.s32.totalorder %s99, %s100
      %p112 = scmp.eq.s32.totalorder %s27, 1
      %p113 = por %p111, %p112
      %p115 = scmp.ne.s32.totalorder %s100, %s114
      %p116 = scmp.eq.s32.totalorder %s27, 0
      %p117 = por %p115, %p116
      %s119 = sadd.s32 %s118, 1
      %p122 = scmp.eq.s32.totalorder %s21, 1
      %p123 = scmp.ne.s32.totalorder %s118, %s120
      %p124 = scmp.eq.s32.totalorder %s21, 0
      %p125 = por %p123, %p124
      %p126 = scmp.ne.s32.totalorder %s118, %s120
      %p127 = scmp.eq.s32.totalorder %s26, 1
      %p128 = por %p126, %p127
      %p129 = scmp.ne.s32.totalorder %s120, %s121
      %p130 = scmp.eq.s32.totalorder %s26, 0
      %p131 = por %p129, %p130
      %p132 = scmp.ne.s32.totalorder %s120, %s121
      %p133 = scmp.eq.s32.totalorder %s27, 1
      %p134 = por %p132, %p133
      %p136 = scmp.ne.s32.totalorder %s121, %s135
      %p137 = scmp.eq.s32.totalorder %s27, 0
      %p138 = por %p136, %p137
      %s140 = sadd.s32 %s139, 1
      %p143 = scmp.eq.s32.totalorder %s21, 1
      %p144 = scmp.ne.s32.totalorder %s139, %s141
      %p145 = scmp.eq.s32.totalorder %s21, 0
      %p146 = por %p144, %p145
      %p147 = scmp.ne.s32.totalorder %s139, %s141
      %p148 = scmp.eq.s32.totalorder %s26, 1
      %p149 = por %p147, %p148
      %p150 = scmp.ne.s32.totalorder %s141, %s142
      %p151 = scmp.eq.s32.totalorder %s26, 0
      %p152 = por %p150, %p151
      %p153 = scmp.ne.s32.totalorder %s141, %s142
      %p154 = scmp.eq.s32.totalorder %s27, 1
      %p155 = por %p153, %p154
      %p157 = scmp.ne.s32.totalorder %s142, %s156
      %p158 = scmp.eq.s32.totalorder %s27, 0
      %p159 = por %p157, %p158
      %s161 = sadd.s32 %s160, 1
      %p164 = scmp.eq.s32.totalorder %s21, 1
      %p165 = scmp.ne.s32.totalorder %s160, %s162
      %p166 = scmp.eq.s32.totalorder %s21, 0
      %p167 = por %p165, %p166
      %p168 = scmp.ne.s32.totalorder %s160, %s162
      %p169 = scmp.eq.s32.totalorder %s26, 1
      %p170 = por %p168, %p169
      %p171 = scmp.ne.s32.totalorder %s162, %s163
      %p172 = scmp.eq.s32.totalorder %s26, 0
      %p173 = por %p171, %p172
      %p174 = scmp.ne.s32.totalorder %s162, %s163
      %p175 = scmp.eq.s32.totalorder %s27, 1
      %p176 = por %p174, %p175
      %p178 = scmp.ne.s32.totalorder %s163, %s177
      %p179 = scmp.eq.s32.totalorder %s27, 0
      %p180 = por %p178, %p179
      %s182 = sadd.s32 %s181, 1
      %p185 = scmp.eq.s32.totalorder %s21, 1
      %p186 = scmp.ne.s32.totalorder %s181, %s183
      %p187 = scmp.eq.s32.totalorder %s21, 0
      %p188 = por %p186, %p187
      %p189 = scmp.ne.s32.totalorder %s181, %s183
      %p190 = scmp.eq.s32.totalorder %s26, 1
      %p191 = por %p189, %p190
      %p192 = scmp.ne.s32.totalorder %s183, %s184
      %p193 = scmp.eq.s32.totalorder %s26, 0
      %p194 = por %p192, %p193
      %p195 = scmp.ne.s32.totalorder %s183, %s184
      %p196 = scmp.eq.s32.totalorder %s27, 1
      %p197 = por %p195, %p196
      %p199 = scmp.ne.s32.totalorder %s184, %s198
      %p200 = scmp.eq.s32.totalorder %s27, 0
      %p201 = por %p199, %p200
      %s203 = sadd.s32 %s202, 1
      %p206 = scmp.eq.s32.totalorder %s21, 1
      %p207 = scmp.ne.s32.totalorder %s202, %s204
      %p208 = scmp.eq.s32.totalorder %s21, 0
      %p209 = por %p207, %p208
      %p210 = scmp.ne.s32.totalorder %s202, %s204
      %p211 = scmp.eq.s32.totalorder %s26, 1
      %p212 = por %p210, %p211
      %p213 = scmp.ne.s32.totalorder %s204, %s205
      %p214 = scmp.eq.s32.totalorder %s26, 0
      %p215 = por %p213, %p214
      %p216 = scmp.ne.s32.totalorder %s204, %s205
      %p217 = scmp.eq.s32.totalorder %s27, 1
      %p218 = por %p216, %p217
      %p220 = scmp.ne.s32.totalorder %s205, %s219
      %p221 = scmp.eq.s32.totalorder %s27, 0
      %p222 = por %p220, %p221
      %s224 = sadd.s32 %s223, 1
      %p227 = scmp.eq.s32.totalorder %s21, 1
      %p228 = scmp.ne.s32.totalorder %s223, %s225
      %p229 = scmp.eq.s32.totalorder %s21, 0
      %p230 = por %p228, %p229
      %p231 = scmp.ne.s32.totalorder %s223, %s225
      %p232 = scmp.eq.s32.totalorder %s26, 1
      %p233 = por %p231, %p232
      %p234 = scmp.ne.s32.totalorder %s225, %s226
      %p235 = scmp.eq.s32.totalorder %s26, 0
      %p236 = por %p234, %p235
      %p237 = scmp.ne.s32.totalorder %s225, %s226
      %p238 = scmp.eq.s32.totalorder %s27, 1
      %p239 = por %p237, %p238
      %p241 = scmp.ne.s32.totalorder %s226, %s240
      %p242 = scmp.eq.s32.totalorder %s27, 0
      %p243 = por %p241, %p242
      %s245 = sadd.s32 %s244, 1
      %p248 = scmp.eq.s32.totalorder %s21, 1
      %p249 = scmp.ne.s32.totalorder %s244, %s246
      %p250 = scmp.eq.s32.totalorder %s21, 0
      %p251 = por %p249, %p250
      %p252 = scmp.ne.s32.totalorder %s244, %s246
      %p253 = scmp.eq.s32.totalorder %s26, 1
      %p254 = por %p252, %p253
      %p255 = scmp.ne.s32.totalorder %s246, %s247
      %p256 = scmp.eq.s32.totalorder %s26, 0
      %p257 = por %p255, %p256
      %p258 = scmp.ne.s32.totalorder %s246, %s247
      %p259 = scmp.eq.s32.totalorder %s27, 1
      %p260 = por %p258, %p259
      %p262 = scmp.ne.s32.totalorder %s247, %s261
      %p263 = scmp.eq.s32.totalorder %s27, 0
      %p264 = por %p262, %p263
      %s266 = sadd.s32 %s265, 1
      %p269 = scmp.eq.s32.totalorder %s21, 1
      %p270 = scmp.ne.s32.totalorder %s265, %s267
      %p271 = scmp.eq.s32.totalorder %s21, 0
      %p272 = por %p270, %p271
      %p273 = scmp.ne.s32.totalorder %s265, %s267
      %p274 = scmp.eq.s32.totalorder %s26, 1
      %p275 = por %p273, %p274
      %p276 = scmp.ne.s32.totalorder %s267, %s268
      %p277 = scmp.eq.s32.totalorder %s26, 0
      %p278 = por %p276, %p277
      %p279 = scmp.ne.s32.totalorder %s267, %s268
      %p280 = scmp.eq.s32.totalorder %s27, 1
      %p281 = por %p279, %p280
      %p283 = scmp.ne.s32.totalorder %s268, %s282
      %p284 = scmp.eq.s32.totalorder %s27, 0
      %p285 = por %p283, %p284
      %s286 = ssub.s32 %s21, %s28
      %p287 = scmp.eq.s32.totalorder %s286, 0
      %s289 = sadd.s32 %s288, 1
      %s290 = scalar_select %p287, %s288, %s289
      %p293 = pneg %p287
      %p294 = scmp.eq.s32.totalorder %s21, 1
      %p295 = por %p293, %p294
      %p296 = scmp.ne.s32.totalorder %s288, %s291
      %p297 = scmp.eq.s32.totalorder %s21, 0
      %p298 = por %p296, %p297
      %p299 = scmp.ne.s32.totalorder %s288, %s291
      %p300 = scmp.eq.s32.totalorder %s26, 1
      %p301 = por %p299, %p300
      %p302 = scmp.ne.s32.totalorder %s291, %s292
      %p303 = scmp.eq.s32.totalorder %s26, 0
      %p304 = por %p302, %p303
      %p305 = scmp.ne.s32.totalorder %s291, %s292
      %p306 = scmp.eq.s32.totalorder %s27, 1
      %p307 = por %p305, %p306
      %p309 = scmp.ne.s32.totalorder %s292, %s308
      %p310 = scmp.eq.s32.totalorder %s27, 0
      %p311 = por %p309, %p310
      %p312 = scmp.le.s32.totalorder 1, %s21
      %p313 = scmp.lt.s32.totalorder %s21, 3
      %p314 = pnand %p312, %p313
      %p315 = pneg %p314
      // Predicated region
      $region9: #{tpu_custom_call.1} parent=5 // pred_check
        _
      $region10: #{tpu_custom_call.1} parent=5 // pred_check_branch
        %317 = sbr.rel (%p314) target = $region12
      $region11: #{tpu_custom_call.1} parent=5 // pred_region
        %s318 = ssub.s32 %s21, 1
        // Predicated region
        $region13: #{tpu_custom_call.1} parent=11 // pred_check
          %p319 = pneg %p68
        $region14: #{tpu_custom_call.1} parent=11 // pred_check_branch
          %321 = sbr.rel (%p319) target = $region16
        $region15: #{tpu_custom_call.1} parent=11 // pred_region
          _
        $region16: #{tpu_custom_call.1} parent=11 // pred_fallthru
          _
        // Predicated region
        $region17: #{tpu_custom_call.1} parent=11 // pred_check
          %p322 = pneg %p89
        $region18: #{tpu_custom_call.1} parent=11 // pred_check_branch
          %324 = sbr.rel (%p322) target = $region20
        $region19: #{tpu_custom_call.1} parent=11 // pred_region
          _
        $region20: #{tpu_custom_call.1} parent=11 // pred_fallthru
          _
        // Predicated region
        $region21: #{tpu_custom_call.1} parent=11 // pred_check
          %p325 = pneg %p110
        $region22: #{tpu_custom_call.1} parent=11 // pred_check_branch
          %327 = sbr.rel (%p325) target = $region24
        $region23: #{tpu_custom_call.1} parent=11 // pred_region
          _
        $region24: #{tpu_custom_call.1} parent=11 // pred_fallthru
          _
        // Predicated region
        $region25: #{tpu_custom_call.1} parent=11 // pred_check
          %p328 = pneg %p131
        $region26: #{tpu_custom_call.1} parent=11 // pred_check_branch
          %330 = sbr.rel (%p328) target = $region28
        $region27: #{tpu_custom_call.1} parent=11 // pred_region
          _
        $region28: #{tpu_custom_call.1} parent=11 // pred_fallthru
          _
        // Predicated region
        $region29: #{tpu_custom_call.1} parent=11 // pred_check
          %p331 = pneg %p152
        $region30: #{tpu_custom_call.1} parent=11 // pred_check_branch
          %333 = sbr.rel (%p331) target = $region32
        $region31: #{tpu_custom_call.1} parent=11 // pred_region
          _
        $region32: #{tpu_custom_call.1} parent=11 // pred_fallthru
          _
        // Predicated region
        $region33: #{tpu_custom_call.1} parent=11 // pred_check
          %p334 = pneg %p173
        $region34: #{tpu_custom_call.1} parent=11 // pred_check_branch
          %336 = sbr.rel (%p334) target = $region36
        $region35: #{tpu_custom_call.1} parent=11 // pred_region
          _
        $region36: #{tpu_custom_call.1} parent=11 // pred_fallthru
          _
        // Predicated region
        $region37: #{tpu_custom_call.1} parent=11 // pred_check
          %p337 = pneg %p194
        $region38: #{tpu_custom_call.1} parent=11 // pred_check_branch
          %339 = sbr.rel (%p337) target = $region40
        $region39: #{tpu_custom_call.1} parent=11 // pred_region
          _
        $region40: #{tpu_custom_call.1} parent=11 // pred_fallthru
          _
        // Predicated region
        $region41: #{tpu_custom_call.1} parent=11 // pred_check
          %p340 = pneg %p215
        $region42: #{tpu_custom_call.1} parent=11 // pred_check_branch
          %342 = sbr.rel (%p340) target = $region44
        $region43: #{tpu_custom_call.1} parent=11 // pred_region
          _
        $region44: #{tpu_custom_call.1} parent=11 // pred_fallthru
          _
        // Predicated region
        $region45: #{tpu_custom_call.1} parent=11 // pred_check
          %p343 = pneg %p236
        $region46: #{tpu_custom_call.1} parent=11 // pred_check_branch
          %345 = sbr.rel (%p343) target = $region48
        $region47: #{tpu_custom_call.1} parent=11 // pred_region
          _
        $region48: #{tpu_custom_call.1} parent=11 // pred_fallthru
          _
        // Predicated region
        $region49: #{tpu_custom_call.1} parent=11 // pred_check
          %p346 = pneg %p257
        $region50: #{tpu_custom_call.1} parent=11 // pred_check_branch
          %348 = sbr.rel (%p346) target = $region52
        $region51: #{tpu_custom_call.1} parent=11 // pred_region
          _
        $region52: #{tpu_custom_call.1} parent=11 // pred_fallthru
          _
        // Predicated region
        $region53: #{tpu_custom_call.1} parent=11 // pred_check
          %p349 = pneg %p278
        $region54: #{tpu_custom_call.1} parent=11 // pred_check_branch
          %351 = sbr.rel (%p349) target = $region56
        $region55: #{tpu_custom_call.1} parent=11 // pred_region
          _
        $region56: #{tpu_custom_call.1} parent=11 // pred_fallthru
          _
      $region12: #{tpu_custom_call.1} parent=5 // pred_fallthru
        _
      %p352 = scmp.lt.s32.totalorder %s21, 2
      // Predicated region
      $region57: #{tpu_custom_call.1} parent=5 // pred_check
        %p353 = pneg %p352
      $region58: #{tpu_custom_call.1} parent=5 // pred_check_branch
        %355 = sbr.rel (%p353) target = $region60
      $region59: #{tpu_custom_call.1} parent=5 // pred_region
        // Predicated region
        $region61: #{tpu_custom_call.1} parent=59 // pred_check
          %p356 = pneg %p41
        $region62: #{tpu_custom_call.1} parent=59 // pred_check_branch
          %358 = sbr.rel (%p356) target = $region64
        $region63: #{tpu_custom_call.1} parent=59 // pred_region
          %p359 = scmp.lt.s32.totalorder %s21, 1
          %s360 = scalar_select %p359, %s21, 1
          %s361 = smul.addr %s360, 8
          %s362 = scalar_lea.vmem %s0, %s361
        $region64: #{tpu_custom_call.1} parent=59 // pred_fallthru
          _
      $region60: #{tpu_custom_call.1} parent=5 // pred_fallthru
        _
      %p363 = scmp.le.s32.totalorder 1, %s21
      %p364 = scmp.lt.s32.totalorder %s21, 3
      %p365 = pnand %p363, %p364
      %p366 = pneg %p365
      // Predicated region
      $region65: #{tpu_custom_call.1} parent=5 // pred_check
        _
      $region66: #{tpu_custom_call.1} parent=5 // pred_check_branch
        %368 = sbr.rel (%p365) target = $region68
      $region67: #{tpu_custom_call.1} parent=5 // pred_region
        %s369 = ssub.s32 %s21, 1
        %p370 = scmp.lt.s32.totalorder %s26, 1
        %s371 = scalar_select %p370, %s26, 1
        %s372 = smul.addr %s371, 8
        %s373 = scalar_lea.vmem %s0, %s372
        %p374 = pneg %p47
        %p375 = pneg %p44
        %p376 = pneg %p68
        %p377 = pneg %p65
        %p378 = pneg %p89
        %p379 = pneg %p86
        %p380 = pneg %p110
        %p381 = pneg %p107
        %p382 = pneg %p131
        %p383 = pneg %p128
        %p384 = pneg %p152
        %p385 = pneg %p149
        %p386 = pneg %p173
        %p387 = pneg %p170
        %p388 = pneg %p194
        %p389 = pneg %p191
        %p390 = pneg %p215
        %p391 = pneg %p212
        %p392 = pneg %p236
        %p393 = pneg %p233
        %p394 = pneg %p257
        %p395 = pneg %p254
        %p396 = pneg %p278
        %p397 = pneg %p275
        %p398 = pneg %p304
        %p399 = pneg %p301
        %s400 = sand.u32 %s291, 1
        %s401 = scalar_lea.sflag [#allocation3], %s400
        %s402 = sand.u32 %s291, 1
        %s403 = smul.addr %s402, 8
        %s404 = scalar_lea.vmem [#allocation2], %s403
        %p405 = scmp.lt.s32.totalorder %s26, 1
        %s406 = scalar_select %p405, %s26, 1
        %s407 = smul.addr %s406, 8
        %s408 = scalar_lea.vmem %s0, %s407
        %v409 = vld [vmem:[%s408] sm:$0xff]
        %v410 = vld [vmem:[%s1] sm:$0x1]
        %v411 = vld [vmem:[%s2] sm:$0x1]
        %vm412 = vcmask 261120
        %v413 = vsel %vm412, %v409, 0.0
        %414 = vadd.xlane.f32.xlu0 %v413
        %v415 = vpop.xlane.xlu0 %414
        %v416 = vrcp.pop 32.0
        %v417 = vmul.f32 %v415, %v416
        %v418 = vsub.f32 %v409, %v417
        %v419 = vmul.f32 %v418, %v418
        %v420 = vsel %vm412, %v419, 0.0
        %421 = vadd.xlane.f32.xlu0 %v420
        %v422 = vpop.xlane.xlu0 %421
        %v423 = vmul.f32 %v422, %v416
        %v424 = vadd.f32 %v423, 1e-05
        %v425 = vrsqrt.pop %v424
        %v426 = vmul.f32 %v418, %v425
        %v428 = vlaneseq
        %v429 = vshrl.u32 %v428, 7
        %v430 = vsub.s32 0, %v429
        %v431 = vrot.slane %v410, %v430
        %v433 = vmul.f32 %v426, %v431
        %v435 = vlaneseq
        %v436 = vshrl.u32 %v435, 7
        %v437 = vsub.s32 0, %v436
        %v438 = vrot.slane %v411, %v437
        %v440 = vadd.f32 %v433, %v438
        %v441 = vld [vmem:[%s3] sm:$0xff]
        %v442 = vld [vmem:[%s3 + $0x8] sm:$0xff]
        %v443 = vld [vmem:[%s3 + $0x10] sm:$0xff]
        %v444 = vld [vmem:[%s3 + $0x18] sm:$0xff]
        %v445 = vld [vmem:[%s3 + $0x20] sm:$0xff]
        %v446 = vld [vmem:[%s3 + $0x28] sm:$0xff]
        %v447 = vld [vmem:[%s3 + $0x30] sm:$0xff]
        %v448 = vld [vmem:[%s3 + $0x38] sm:$0xff]
        %v449 = vld [vmem:[%s3 + $0x40] sm:$0xff]
        %v450 = vld [vmem:[%s3 + $0x48] sm:$0xff]
        %v451 = vld [vmem:[%s3 + $0x50] sm:$0xff]
        %v452 = vld [vmem:[%s3 + $0x58] sm:$0xff]
        %v453 = vld [vmem:[%s3 + $0x60] sm:$0xff]
        %v454 = vld [vmem:[%s3 + $0x68] sm:$0xff]
        %v455 = vld [vmem:[%s3 + $0x70] sm:$0xff]
        %v456 = vld [vmem:[%s3 + $0x78] sm:$0xff]
        %v458 = vsel %vm412, %v440, 0
        %460 = vmatprep.subr.mxu0 0.0
        %461 = vmatpush1.msra.mxu0 %v441
        %462 = vmatprep.subr.mxu0 0.0
        %463 = vmatpush1.msra.mxu0 %v442
        %464 = vmatprep.subr.mxu0 0.0
        %465 = vmatpush1.msra.mxu0 %v443
        %466 = vmatprep.subr.mxu0 0.0
        %467 = vmatpush1.msra.mxu0 %v444
        %468 = vmatprep.subr.mxu0 0.0
        %469 = vmatpush1.msra.mxu0 0.0
        %470 = vmatprep.subr.mxu0 0.0
        %471 = vmatpush1.msra.mxu0 0.0
        %472 = vmatprep.subr.mxu0 0.0
        %473 = vmatpush1.msra.mxu0 0.0
        %474 = vmatprep.subr.mxu0 0.0
        %475 = vmatpush1.msra.mxu0 0.0
        %476 = vmatprep.subr.mxu0 0.0
        %477 = vmatpush1.msra.mxu0 0.0
        %478 = vmatprep.subr.mxu0 0.0
        %479 = vmatpush1.msra.mxu0 0.0
        %480 = vmatprep.subr.mxu0 0.0
        %481 = vmatpush1.msra.mxu0 0.0
        %482 = vmatprep.subr.mxu0 0.0
        %483 = vmatpush1.msra.mxu0 0.0
        %484 = vmatprep.subr.mxu0 0.0
        %485 = vmatpush1.msra.mxu0 0.0
        %486 = vmatprep.subr.mxu0 0.0
        %487 = vmatpush1.msra.mxu0 0.0
        %488 = vmatprep.subr.mxu0 0.0
        %489 = vmatpush1.msra.mxu0 0.0
        %490 = vmatprep.subr.mxu0 0.0
        %491 = vmatpush1.msra.mxu0 0.0
        %492 = vmatprep.subr.mxu0 0.0
        %493 = vmatpush1.msra.mxu0 0.0
        %494 = vmatprep.subr.mxu0 0.0
        %495 = vmatpush1.msra.mxu0 0.0
        %496 = vmatprep.subr.mxu0 0.0
        %497 = vmatpush1.msra.mxu0 0.0
        %498 = vmatprep.subr.mxu0 0.0
        %499 = vmatpush1.msra.mxu0 0.0
        %500 = vmatprep.subr.mxu0 0.0
        %501 = vmatpush1.msra.mxu0 0.0
        %502 = vmatprep.subr.mxu0 0.0
        %503 = vmatpush1.msra.mxu0 0.0
        %504 = vmatprep.subr.mxu0 0.0
        %505 = vmatpush1.msra.mxu0 0.0
        %506 = vmatprep.subr.mxu0 0.0
        %507 = vmatpush1.msra.mxu0 0.0
        %508 = vmatprep.subr.mxu0 0.0
        %509 = vmatpush1.msra.mxu0 0.0
        %510 = vmatprep.subr.mxu0 0.0
        %511 = vmatpush1.msra.mxu0 0.0
        %512 = vmatprep.subr.mxu0 0.0
        %513 = vmatpush1.msra.mxu0 0.0
        %514 = vmatprep.subr.mxu0 0.0
        %515 = vmatpush1.msra.mxu0 0.0
        %516 = vmatprep.subr.mxu0 0.0
        %517 = vmatpush1.msra.mxu0 0.0
        %518 = vmatprep.subr.mxu0 0.0
        %519 = vmatpush1.msra.mxu0 0.0
        %520 = vmatprep.subr.mxu0 0.0
        %521 = vmatpush1.msra.mxu0 0.0
        %522 = vmatprep.subr.mxu0 0.0
        %523 = vmatpush1.msra.mxu0 0.0
        %524 = vmatprep.mubr.f32.mxu0 0.0
        %525 = vmatmul.mubr.f32.gmra.mrb[0].mxu0 %v458
        %v526 = vpop.f32.mrb[0].mxu0
        %v527 = vadd.f32 0.0, %v526
        %v528 = vpop.f32.mrb[0].mxu0
        %529 = vdwg.mxu0
        %530 = vmatprep.subr.mxu0 0.0
        %531 = vmatpush1.msra.mxu0 %v445
        %532 = vmatprep.subr.mxu0 0.0
        %533 = vmatpush1.msra.mxu0 %v446
        %534 = vmatprep.subr.mxu0 0.0
        %535 = vmatpush1.msra.mxu0 %v447
        %536 = vmatprep.subr.mxu0 0.0
        %537 = vmatpush1.msra.mxu0 %v448
        %538 = vmatprep.subr.mxu0 0.0
        %539 = vmatpush1.msra.mxu0 0.0
        %540 = vmatprep.subr.mxu0 0.0
        %541 = vmatpush1.msra.mxu0 0.0
        %542 = vmatprep.subr.mxu0 0.0
        %543 = vmatpush1.msra.mxu0 0.0
        %544 = vmatprep.subr.mxu0 0.0
        %545 = vmatpush1.msra.mxu0 0.0
        %546 = vmatprep.subr.mxu0 0.0
        %547 = vmatpush1.msra.mxu0 0.0
        %548 = vmatprep.subr.mxu0 0.0
        %549 = vmatpush1.msra.mxu0 0.0
        %550 = vmatprep.subr.mxu0 0.0
        %551 = vmatpush1.msra.mxu0 0.0
        %552 = vmatprep.subr.mxu0 0.0
        %553 = vmatpush1.msra.mxu0 0.0
        %554 = vmatprep.subr.mxu0 0.0
        %555 = vmatpush1.msra.mxu0 0.0
        %556 = vmatprep.subr.mxu0 0.0
        %557 = vmatpush1.msra.mxu0 0.0
        %558 = vmatprep.subr.mxu0 0.0
        %559 = vmatpush1.msra.mxu0 0.0
        %560 = vmatprep.subr.mxu0 0.0
        %561 = vmatpush1.msra.mxu0 0.0
        %562 = vmatprep.subr.mxu0 0.0
        %563 = vmatpush1.msra.mxu0 0.0
        %564 = vmatprep.subr.mxu0 0.0
        %565 = vmatpush1.msra.mxu0 0.0
        %566 = vmatprep.subr.mxu0 0.0
        %567 = vmatpush1.msra.mxu0 0.0
        %568 = vmatprep.subr.mxu0 0.0
        %569 = vmatpush1.msra.mxu0 0.0
        %570 = vmatprep.subr.mxu0 0.0
        %571 = vmatpush1.msra.mxu0 0.0
        %572 = vmatprep.subr.mxu0 0.0
        %573 = vmatpush1.msra.mxu0 0.0
        %574 = vmatprep.subr.mxu0 0.0
        %575 = vmatpush1.msra.mxu0 0.0
        %576 = vmatprep.subr.mxu0 0.0
        %577 = vmatpush1.msra.mxu0 0.0
        %578 = vmatprep.subr.mxu0 0.0
        %579 = vmatpush1.msra.mxu0 0.0
        %580 = vmatprep.subr.mxu0 0.0
        %581 = vmatpush1.msra.mxu0 0.0
        %582 = vmatprep.subr.mxu0 0.0
        %583 = vmatpush1.msra.mxu0 0.0
        %584 = vmatprep.subr.mxu0 0.0
        %585 = vmatpush1.msra.mxu0 0.0
        %586 = vmatprep.subr.mxu0 0.0
        %587 = vmatpush1.msra.mxu0 0.0
        %588 = vmatprep.subr.mxu0 0.0
        %589 = vmatpush1.msra.mxu0 0.0
        %590 = vmatprep.subr.mxu0 0.0
        %591 = vmatpush1.msra.mxu0 0.0
        %592 = vmatprep.subr.mxu0 0.0
        %593 = vmatpush1.msra.mxu0 0.0
        %594 = vmatprep.mubr.f32.mxu0 0.0
        %595 = vmatmul.mubr.f32.gmra.mrb[0].mxu0 %v458
        %v596 = vpop.f32.mrb[0].mxu0
        %v597 = vadd.f32 0.0, %v596
        %v598 = vpop.f32.mrb[0].mxu0
        %599 = vdwg.mxu0
        %600 = vmatprep.subr.mxu0 0.0
        %601 = vmatpush1.msra.mxu0 %v449
        %602 = vmatprep.subr.mxu0 0.0
        %603 = vmatpush1.msra.mxu0 %v450
        %604 = vmatprep.subr.mxu0 0.0
        %605 = vmatpush1.msra.mxu0 %v451
        %606 = vmatprep.subr.mxu0 0.0
        %607 = vmatpush1.msra.mxu0 %v452
        %608 = vmatprep.subr.mxu0 0.0
        %609 = vmatpush1.msra.mxu0 0.0
        %610 = vmatprep.subr.mxu0 0.0
        %611 = vmatpush1.msra.mxu0 0.0
        %612 = vmatprep.subr.mxu0 0.0
        %613 = vmatpush1.msra.mxu0 0.0
        %614 = vmatprep.subr.mxu0 0.0
        %615 = vmatpush1.msra.mxu0 0.0
        %616 = vmatprep.subr.mxu0 0.0
        %617 = vmatpush1.msra.mxu0 0.0
        %618 = vmatprep.subr.mxu0 0.0
        %619 = vmatpush1.msra.mxu0 0.0
        %620 = vmatprep.subr.mxu0 0.0
        %621 = vmatpush1.msra.mxu0 0.0
        %622 = vmatprep.subr.mxu0 0.0
        %623 = vmatpush1.msra.mxu0 0.0
        %624 = vmatprep.subr.mxu0 0.0
        %625 = vmatpush1.msra.mxu0 0.0
        %626 = vmatprep.subr.mxu0 0.0
        %627 = vmatpush1.msra.mxu0 0.0
        %628 = vmatprep.subr.mxu0 0.0
        %629 = vmatpush1.msra.mxu0 0.0
        %630 = vmatprep.subr.mxu0 0.0
        %631 = vmatpush1.msra.mxu0 0.0
        %632 = vmatprep.subr.mxu0 0.0
        %633 = vmatpush1.msra.mxu0 0.0
        %634 = vmatprep.subr.mxu0 0.0
        %635 = vmatpush1.msra.mxu0 0.0
        %636 = vmatprep.subr.mxu0 0.0
        %637 = vmatpush1.msra.mxu0 0.0
        %638 = vmatprep.subr.mxu0 0.0
        %639 = vmatpush1.msra.mxu0 0.0
        %640 = vmatprep.subr.mxu0 0.0
        %641 = vmatpush1.msra.mxu0 0.0
        %642 = vmatprep.subr.mxu0 0.0
        %643 = vmatpush1.msra.mxu0 0.0
        %644 = vmatprep.subr.mxu0 0.0
        %645 = vmatpush1.msra.mxu0 0.0
        %646 = vmatprep.subr.mxu0 0.0
        %647 = vmatpush1.msra.mxu0 0.0
        %648 = vmatprep.subr.mxu0 0.0
        %649 = vmatpush1.msra.mxu0 0.0
        %650 = vmatprep.subr.mxu0 0.0
        %651 = vmatpush1.msra.mxu0 0.0
        %652 = vmatprep.subr.mxu0 0.0
        %653 = vmatpush1.msra.mxu0 0.0
        %654 = vmatprep.subr.mxu0 0.0
        %655 = vmatpush1.msra.mxu0 0.0
        %656 = vmatprep.subr.mxu0 0.0
        %657 = vmatpush1.msra.mxu0 0.0
        %658 = vmatprep.subr.mxu0 0.0
        %659 = vmatpush1.msra.mxu0 0.0
        %660 = vmatprep.subr.mxu0 0.0
        %661 = vmatpush1.msra.mxu0 0.0
        %662 = vmatprep.subr.mxu0 0.0
        %663 = vmatpush1.msra.mxu0 0.0
        %664 = vmatprep.mubr.f32.mxu0 0.0
        %665 = vmatmul.mubr.f32.gmra.mrb[0].mxu0 %v458
        %v666 = vpop.f32.mrb[0].mxu0
        %v667 = vadd.f32 0.0, %v666
        %v668 = vpop.f32.mrb[0].mxu0
        %669 = vdwg.mxu0
        %670 = vmatprep.subr.mxu0 0.0
        %671 = vmatpush1.msra.mxu0 %v453
        %672 = vmatprep.subr.mxu0 0.0
        %673 = vmatpush1.msra.mxu0 %v454
        %674 = vmatprep.subr.mxu0 0.0
        %675 = vmatpush1.msra.mxu0 %v455
        %676 = vmatprep.subr.mxu0 0.0
        %677 = vmatpush1.msra.mxu0 %v456
        %678 = vmatprep.subr.mxu0 0.0
        %679 = vmatpush1.msra.mxu0 0.0
        %680 = vmatprep.subr.mxu0 0.0
        %681 = vmatpush1.msra.mxu0 0.0
        %682 = vmatprep.subr.mxu0 0.0
        %683 = vmatpush1.msra.mxu0 0.0
        %684 = vmatprep.subr.mxu0 0.0
        %685 = vmatpush1.msra.mxu0 0.0
        %686 = vmatprep.subr.mxu0 0.0
        %687 = vmatpush1.msra.mxu0 0.0
        %688 = vmatprep.subr.mxu0 0.0
        %689 = vmatpush1.msra.mxu0 0.0
        %690 = vmatprep.subr.mxu0 0.0
        %691 = vmatpush1.msra.mxu0 0.0
        %692 = vmatprep.subr.mxu0 0.0
        %693 = vmatpush1.msra.mxu0 0.0
        %694 = vmatprep.subr.mxu0 0.0
        %695 = vmatpush1.msra.mxu0 0.0
        %696 = vmatprep.subr.mxu0 0.0
        %697 = vmatpush1.msra.mxu0 0.0
        %698 = vmatprep.subr.mxu0 0.0
        %699 = vmatpush1.msra.mxu0 0.0
        %700 = vmatprep.subr.mxu0 0.0
        %701 = vmatpush1.msra.mxu0 0.0
        %702 = vmatprep.subr.mxu0 0.0
        %703 = vmatpush1.msra.mxu0 0.0
        %704 = vmatprep.subr.mxu0 0.0
        %705 = vmatpush1.msra.mxu0 0.0
        %706 = vmatprep.subr.mxu0 0.0
        %707 = vmatpush1.msra.mxu0 0.0
        %708 = vmatprep.subr.mxu0 0.0
        %709 = vmatpush1.msra.mxu0 0.0
        %710 = vmatprep.subr.mxu0 0.0
        %711 = vmatpush1.msra.mxu0 0.0
        %712 = vmatprep.subr.mxu0 0.0
        %713 = vmatpush1.msra.mxu0 0.0
        %714 = vmatprep.subr.mxu0 0.0
        %715 = vmatpush1.msra.mxu0 0.0
        %716 = vmatprep.subr.mxu0 0.0
        %717 = vmatpush1.msra.mxu0 0.0
        %718 = vmatprep.subr.mxu0 0.0
        %719 = vmatpush1.msra.mxu0 0.0
        %720 = vmatprep.subr.mxu0 0.0
        %721 = vmatpush1.msra.mxu0 0.0
        %722 = vmatprep.subr.mxu0 0.0
        %723 = vmatpush1.msra.mxu0 0.0
        %724 = vmatprep.subr.mxu0 0.0
        %725 = vmatpush1.msra.mxu0 0.0
        %726 = vmatprep.subr.mxu0 0.0
        %727 = vmatpush1.msra.mxu0 0.0
        %728 = vmatprep.subr.mxu0 0.0
        %729 = vmatpush1.msra.mxu0 0.0
        %730 = vmatprep.subr.mxu0 0.0
        %731 = vmatpush1.msra.mxu0 0.0
        %732 = vmatprep.subr.mxu0 0.0
        %733 = vmatpush1.msra.mxu0 0.0
        %734 = vmatprep.mubr.f32.mxu0 0.0
        %735 = vmatmul.mubr.f32.gmra.mrb[0].mxu0 %v458
        %v736 = vpop.f32.mrb[0].mxu0
        %v737 = vadd.f32 0.0, %v736
        %v738 = vpop.f32.mrb[0].mxu0
        %739 = vdwg.mxu0
        %741 = vrot.lane.b32.xlu0 %v527, 120
        %v742 = vpop.permute.xlu0 %741
        %vm743 = vcmask 64512
        %v744 = vsel %vm743, %v527, 0
        %v746 = vsel %vm743, %v742, 0
        %748 = vmatprep.subr.mxu0 0.0
        %749 = vmatpush1.xpose.msra.mxu0 %v746
        %750 = vmatprep.subr.mxu0 0.0
        %751 = vmatpush1.xpose.msra.mxu0 0.0
        %752 = vmatprep.subr.mxu0 0.0
        %753 = vmatpush1.xpose.msra.mxu0 0.0
        %754 = vmatprep.subr.mxu0 0.0
        %755 = vmatpush1.xpose.msra.mxu0 0.0
        %756 = vmatprep.subr.mxu0 0.0
        %757 = vmatpush1.xpose.msra.mxu0 0.0
        %758 = vmatprep.subr.mxu0 0.0
        %759 = vmatpush1.xpose.msra.mxu0 0.0
        %760 = vmatprep.subr.mxu0 0.0
        %761 = vmatpush1.xpose.msra.mxu0 0.0
        %762 = vmatprep.subr.mxu0 0.0
        %763 = vmatpush1.xpose.msra.mxu0 0.0
        %764 = vmatprep.subr.mxu0 0.0
        %765 = vmatpush1.xpose.msra.mxu0 0.0
        %766 = vmatprep.subr.mxu0 0.0
        %767 = vmatpush1.xpose.msra.mxu0 0.0
        %768 = vmatprep.subr.mxu0 0.0
        %769 = vmatpush1.xpose.msra.mxu0 0.0
        %770 = vmatprep.subr.mxu0 0.0
        %771 = vmatpush1.xpose.msra.mxu0 0.0
        %772 = vmatprep.subr.mxu0 0.0
        %773 = vmatpush1.xpose.msra.mxu0 0.0
        %774 = vmatprep.subr.mxu0 0.0
        %775 = vmatpush1.xpose.msra.mxu0 0.0
        %776 = vmatprep.subr.mxu0 0.0
        %777 = vmatpush1.xpose.msra.mxu0 0.0
        %778 = vmatprep.subr.mxu0 0.0
        %779 = vmatpush1.xpose.msra.mxu0 0.0
        %780 = vmatprep.subr.mxu0 0.0
        %781 = vmatpush1.xpose.msra.mxu0 0.0
        %782 = vmatprep.subr.mxu0 0.0
        %783 = vmatpush1.xpose.msra.mxu0 0.0
        %784 = vmatprep.subr.mxu0 0.0
        %785 = vmatpush1.xpose.msra.mxu0 0.0
        %786 = vmatprep.subr.mxu0 0.0
        %787 = vmatpush1.xpose.msra.mxu0 0.0
        %788 = vmatprep.subr.mxu0 0.0
        %789 = vmatpush1.xpose.msra.mxu0 0.0
        %790 = vmatprep.subr.mxu0 0.0
        %791 = vmatpush1.xpose.msra.mxu0 0.0
        %792 = vmatprep.subr.mxu0 0.0
        %793 = vmatpush1.xpose.msra.mxu0 0.0
        %794 = vmatprep.subr.mxu0 0.0
        %795 = vmatpush1.xpose.msra.mxu0 0.0
        %796 = vmatprep.subr.mxu0 0.0
        %797 = vmatpush1.xpose.msra.mxu0 0.0
        %798 = vmatprep.subr.mxu0 0.0
        %799 = vmatpush1.xpose.msra.mxu0 0.0
        %800 = vmatprep.subr.mxu0 0.0
        %801 = vmatpush1.xpose.msra.mxu0 0.0
        %802 = vmatprep.subr.mxu0 0.0
        %803 = vmatpush1.xpose.msra.mxu0 0.0
        %804 = vmatprep.subr.mxu0 0.0
        %805 = vmatpush1.xpose.msra.mxu0 0.0
        %806 = vmatprep.subr.mxu0 0.0
        %807 = vmatpush1.xpose.msra.mxu0 0.0
        %808 = vmatprep.subr.mxu0 0.0
        %809 = vmatpush1.xpose.msra.mxu0 0.0
        %810 = vmatprep.subr.mxu0 0.0
        %811 = vmatpush1.xpose.msra.mxu0 0.0
        %812 = vmatprep.mubr.f32.mxu0 0.0
        %813 = vmatmul.mubr.f32.gmra.mrb[0].mxu0 %v744
        %v814 = vpop.f32.mrb[0].mxu0
        %v815 = vadd.f32 0.0, %v814
        %v816 = vpop.f32.mrb[0].mxu0
        %817 = vdwg.mxu0
        %819 = vrot.lane.b32.xlu0 %v597, 120
        %v820 = vpop.permute.xlu0 %819
        %v821 = vsel %vm743, %v597, 0
        %v823 = vsel %vm743, %v820, 0
        %825 = vmatprep.subr.mxu0 0.0
        %826 = vmatpush1.xpose.msra.mxu0 %v823
        %827 = vmatprep.subr.mxu0 0.0
        %828 = vmatpush1.xpose.msra.mxu0 0.0
        %829 = vmatprep.subr.mxu0 0.0
        %830 = vmatpush1.xpose.msra.mxu0 0.0
        %831 = vmatprep.subr.mxu0 0.0
        %832 = vmatpush1.xpose.msra.mxu0 0.0
        %833 = vmatprep.subr.mxu0 0.0
        %834 = vmatpush1.xpose.msra.mxu0 0.0
        %835 = vmatprep.subr.mxu0 0.0
        %836 = vmatpush1.xpose.msra.mxu0 0.0
        %837 = vmatprep.subr.mxu0 0.0
        %838 = vmatpush1.xpose.msra.mxu0 0.0
        %839 = vmatprep.subr.mxu0 0.0
        %840 = vmatpush1.xpose.msra.mxu0 0.0
        %841 = vmatprep.subr.mxu0 0.0
        %842 = vmatpush1.xpose.msra.mxu0 0.0
        %843 = vmatprep.subr.mxu0 0.0
        %844 = vmatpush1.xpose.msra.mxu0 0.0
        %845 = vmatprep.subr.mxu0 0.0
        %846 = vmatpush1.xpose.msra.mxu0 0.0
        %847 = vmatprep.subr.mxu0 0.0
        %848 = vmatpush1.xpose.msra.mxu0 0.0
        %849 = vmatprep.subr.mxu0 0.0
        %850 = vmatpush1.xpose.msra.mxu0 0.0
        %851 = vmatprep.subr.mxu0 0.0
        %852 = vmatpush1.xpose.msra.mxu0 0.0
        %853 = vmatprep.subr.mxu0 0.0
        %854 = vmatpush1.xpose.msra.mxu0 0.0
        %855 = vmatprep.subr.mxu0 0.0
        %856 = vmatpush1.xpose.msra.mxu0 0.0
        %857 = vmatprep.subr.mxu0 0.0
        %858 = vmatpush1.xpose.msra.mxu0 0.0
        %859 = vmatprep.subr.mxu0 0.0
        %860 = vmatpush1.xpose.msra.mxu0 0.0
        %861 = vmatprep.subr.mxu0 0.0
        %862 = vmatpush1.xpose.msra.mxu0 0.0
        %863 = vmatprep.subr.mxu0 0.0
        %864 = vmatpush1.xpose.msra.mxu0 0.0
        %865 = vmatprep.subr.mxu0 0.0
        %866 = vmatpush1.xpose.msra.mxu0 0.0
        %867 = vmatprep.subr.mxu0 0.0
        %868 = vmatpush1.xpose.msra.mxu0 0.0
        %869 = vmatprep.subr.mxu0 0.0
        %870 = vmatpush1.xpose.msra.mxu0 0.0
        %871 = vmatprep.subr.mxu0 0.0
        %872 = vmatpush1.xpose.msra.mxu0 0.0
        %873 = vmatprep.subr.mxu0 0.0
        %874 = vmatpush1.xpose.msra.mxu0 0.0
        %875 = vmatprep.subr.mxu0 0.0
        %876 = vmatpush1.xpose.msra.mxu0 0.0
        %877 = vmatprep.subr.mxu0 0.0
        %878 = vmatpush1.xpose.msra.mxu0 0.0
        %879 = vmatprep.subr.mxu0 0.0
        %880 = vmatpush1.xpose.msra.mxu0 0.0
        %881 = vmatprep.subr.mxu0 0.0
        %882 = vmatpush1.xpose.msra.mxu0 0.0
        %883 = vmatprep.subr.mxu0 0.0
        %884 = vmatpush1.xpose.msra.mxu0 0.0
        %885 = vmatprep.subr.mxu0 0.0
        %886 = vmatpush1.xpose.msra.mxu0 0.0
        %887 = vmatprep.subr.mxu0 0.0
        %888 = vmatpush1.xpose.msra.mxu0 0.0
        %889 = vmatprep.mubr.f32.mxu0 0.0
        %890 = vmatmul.mubr.f32.gmra.mrb[0].mxu0 %v821
        %v891 = vpop.f32.mrb[0].mxu0
        %v892 = vadd.f32 0.0, %v891
        %v893 = vpop.f32.mrb[0].mxu0
        %894 = vdwg.mxu0
        %896 = vrot.lane.b32.xlu0 %v667, 120
        %v897 = vpop.permute.xlu0 %896
        %v898 = vsel %vm743, %v667, 0
        %v900 = vsel %vm743, %v897, 0
        %902 = vmatprep.subr.mxu0 0.0
        %903 = vmatpush1.xpose.msra.mxu0 %v900
        %904 = vmatprep.subr.mxu0 0.0
        %905 = vmatpush1.xpose.msra.mxu0 0.0
        %906 = vmatprep.subr.mxu0 0.0
        %907 = vmatpush1.xpose.msra.mxu0 0.0
        %908 = vmatprep.subr.mxu0 0.0
        %909 = vmatpush1.xpose.msra.mxu0 0.0
        %910 = vmatprep.subr.mxu0 0.0
        %911 = vmatpush1.xpose.msra.mxu0 0.0
        %912 = vmatprep.subr.mxu0 0.0
        %913 = vmatpush1.xpose.msra.mxu0 0.0
        %914 = vmatprep.subr.mxu0 0.0
        %915 = vmatpush1.xpose.msra.mxu0 0.0
        %916 = vmatprep.subr.mxu0 0.0
        %917 = vmatpush1.xpose.msra.mxu0 0.0
        %918 = vmatprep.subr.mxu0 0.0
        %919 = vmatpush1.xpose.msra.mxu0 0.0
        %920 = vmatprep.subr.mxu0 0.0
        %921 = vmatpush1.xpose.msra.mxu0 0.0
        %922 = vmatprep.subr.mxu0 0.0
        %923 = vmatpush1.xpose.msra.mxu0 0.0
        %924 = vmatprep.subr.mxu0 0.0
        %925 = vmatpush1.xpose.msra.mxu0 0.0
        %926 = vmatprep.subr.mxu0 0.0
        %927 = vmatpush1.xpose.msra.mxu0 0.0
        %928 = vmatprep.subr.mxu0 0.0
        %929 = vmatpush1.xpose.msra.mxu0 0.0
        %930 = vmatprep.subr.mxu0 0.0
        %931 = vmatpush1.xpose.msra.mxu0 0.0
        %932 = vmatprep.subr.mxu0 0.0
        %933 = vmatpush1.xpose.msra.mxu0 0.0
        %934 = vmatprep.subr.mxu0 0.0
        %935 = vmatpush1.xpose.msra.mxu0 0.0
        %936 = vmatprep.subr.mxu0 0.0
        %937 = vmatpush1.xpose.msra.mxu0 0.0
        %938 = vmatprep.subr.mxu0 0.0
        %939 = vmatpush1.xpose.msra.mxu0 0.0
        %940 = vmatprep.subr.mxu0 0.0
        %941 = vmatpush1.xpose.msra.mxu0 0.0
        %942 = vmatprep.subr.mxu0 0.0
        %943 = vmatpush1.xpose.msra.mxu0 0.0
        %944 = vmatprep.subr.mxu0 0.0
        %945 = vmatpush1.xpose.msra.mxu0 0.0
        %946 = vmatprep.subr.mxu0 0.0
        %947 = vmatpush1.xpose.msra.mxu0 0.0
        %948 = vmatprep.subr.mxu0 0.0
        %949 = vmatpush1.xpose.msra.mxu0 0.0
        %950 = vmatprep.subr.mxu0 0.0
        %951 = vmatpush1.xpose.msra.mxu0 0.0
        %952 = vmatprep.subr.mxu0 0.0
        %953 = vmatpush1.xpose.msra.mxu0 0.0
        %954 = vmatprep.subr.mxu0 0.0
        %955 = vmatpush1.xpose.msra.mxu0 0.0
        %956 = vmatprep.subr.mxu0 0.0
        %957 = vmatpush1.xpose.msra.mxu0 0.0
        %958 = vmatprep.subr.mxu0 0.0
        %959 = vmatpush1.xpose.msra.mxu0 0.0
        %960 = vmatprep.subr.mxu0 0.0
        %961 = vmatpush1.xpose.msra.mxu0 0.0
        %962 = vmatprep.subr.mxu0 0.0
        %963 = vmatpush1.xpose.msra.mxu0 0.0
        %964 = vmatprep.subr.mxu0 0.0
        %965 = vmatpush1.xpose.msra.mxu0 0.0
        %966 = vmatprep.mubr.f32.mxu0 0.0
        %967 = vmatmul.mubr.f32.gmra.mrb[0].mxu0 %v898
        %v968 = vpop.f32.mrb[0].mxu0
        %v969 = vadd.f32 0.0, %v968
        %v970 = vpop.f32.mrb[0].mxu0
        %971 = vdwg.mxu0
        %973 = vrot.lane.b32.xlu0 %v737, 120
        %v974 = vpop.permute.xlu0 %973
        %v975 = vsel %vm743, %v737, 0
        %v977 = vsel %vm743, %v974, 0
        %979 = vmatprep.subr.mxu0 0.0
        %980 = vmatpush1.xpose.msra.mxu0 %v977
        %981 = vmatprep.subr.mxu0 0.0
        %982 = vmatpush1.xpose.msra.mxu0 0.0
        %983 = vmatprep.subr.mxu0 0.0
        %984 = vmatpush1.xpose.msra.mxu0 0.0
        %985 = vmatprep.subr.mxu0 0.0
        %986 = vmatpush1.xpose.msra.mxu0 0.0
        %987 = vmatprep.subr.mxu0 0.0
        %988 = vmatpush1.xpose.msra.mxu0 0.0
        %989 = vmatprep.subr.mxu0 0.0
        %990 = vmatpush1.xpose.msra.mxu0 0.0
        %991 = vmatprep.subr.mxu0 0.0
        %992 = vmatpush1.xpose.msra.mxu0 0.0
        %993 = vmatprep.subr.mxu0 0.0
        %994 = vmatpush1.xpose.msra.mxu0 0.0
        %995 = vmatprep.subr.mxu0 0.0
        %996 = vmatpush1.xpose.msra.mxu0 0.0
        %997 = vmatprep.subr.mxu0 0.0
        %998 = vmatpush1.xpose.msra.mxu0 0.0
        %999 = vmatprep.subr.mxu0 0.0
        %1000 = vmatpush1.xpose.msra.mxu0 0.0
        %1001 = vmatprep.subr.mxu0 0.0
        %1002 = vmatpush1.xpose.msra.mxu0 0.0
        %1003 = vmatprep.subr.mxu0 0.0
        %1004 = vmatpush1.xpose.msra.mxu0 0.0
        %1005 = vmatprep.subr.mxu0 0.0
        %1006 = vmatpush1.xpose.msra.mxu0 0.0
        %1007 = vmatprep.subr.mxu0 0.0
        %1008 = vmatpush1.xpose.msra.mxu0 0.0
        %1009 = vmatprep.subr.mxu0 0.0
        %1010 = vmatpush1.xpose.msra.mxu0 0.0
        %1011 = vmatprep.subr.mxu0 0.0
        %1012 = vmatpush1.xpose.msra.mxu0 0.0
        %1013 = vmatprep.subr.mxu0 0.0
        %1014 = vmatpush1.xpose.msra.mxu0 0.0
        %1015 = vmatprep.subr.mxu0 0.0
        %1016 = vmatpush1.xpose.msra.mxu0 0.0
        %1017 = vmatprep.subr.mxu0 0.0
        %1018 = vmatpush1.xpose.msra.mxu0 0.0
        %1019 = vmatprep.subr.mxu0 0.0
        %1020 = vmatpush1.xpose.msra.mxu0 0.0
        %1021 = vmatprep.subr.mxu0 0.0
        %1022 = vmatpush1.xpose.msra.mxu0 0.0
        %1023 = vmatprep.subr.mxu0 0.0
        %1024 = vmatpush1.xpose.msra.mxu0 0.0
        %1025 = vmatprep.subr.mxu0 0.0
        %1026 = vmatpush1.xpose.msra.mxu0 0.0
        %1027 = vmatprep.subr.mxu0 0.0
        %1028 = vmatpush1.xpose.msra.mxu0 0.0
        %1029 = vmatprep.subr.mxu0 0.0
        %1030 = vmatpush1.xpose.msra.mxu0 0.0
        %1031 = vmatprep.subr.mxu0 0.0
        %1032 = vmatpush1.xpose.msra.mxu0 0.0
        %1033 = vmatprep.subr.mxu0 0.0
        %1034 = vmatpush1.xpose.msra.mxu0 0.0
        %1035 = vmatprep.subr.mxu0 0.0
        %1036 = vmatpush1.xpose.msra.mxu0 0.0
        %1037 = vmatprep.subr.mxu0 0.0
        %1038 = vmatpush1.xpose.msra.mxu0 0.0
        %1039 = vmatprep.subr.mxu0 0.0
        %1040 = vmatpush1.xpose.msra.mxu0 0.0
        %1041 = vmatprep.subr.mxu0 0.0
        %1042 = vmatpush1.xpose.msra.mxu0 0.0
        %1043 = vmatprep.mubr.f32.mxu0 0.0
        %1044 = vmatmul.mubr.f32.gmra.mrb[0].mxu0 %v975
        %v1045 = vpop.f32.mrb[0].mxu0
        %v1046 = vadd.f32 0.0, %v1045
        %v1047 = vpop.f32.mrb[0].mxu0
        %1048 = vdwg.mxu0
        %v1049 = vmul.f32 %v815, 0.35355338
        %v1050 = vmul.f32 %v892, 0.35355338
        %v1051 = vmul.f32 %v969, 0.35355338
        %v1052 = vmul.f32 %v1046, 0.35355338
        %v1053 = vsel %vm743, %v1049, -inf
        %1054 = vmax.xlane.f32.xlu0 %v1053
        %v1055 = vpop.xlane.xlu0 %1054
        %v1056 = vsel %vm743, %v1050, -inf
        %1057 = vmax.xlane.f32.xlu0 %v1056
        %v1058 = vpop.xlane.xlu0 %1057
        %v1059 = vsel %vm743, %v1051, -inf
        %1060 = vmax.xlane.f32.xlu0 %v1059
        %v1061 = vpop.xlane.xlu0 %1060
        %v1062 = vsel %vm743, %v1052, -inf
        %1063 = vmax.xlane.f32.xlu0 %v1062
        %v1064 = vpop.xlane.xlu0 %1063
        %v1065 = vsub.f32 %v1049, %v1055
        %v1066 = vsub.f32 %v1050, %v1058
        %v1067 = vsub.f32 %v1051, %v1061
        %v1068 = vsub.f32 %v1052, %v1064
        %v1069 = vmul.f32 %v1065, 1.442695
        %v1070 = vpow.pop %v1069
        %v1071 = vmul.f32 %v1066, 1.442695
        %v1072 = vpow.pop %v1071
        %v1073 = vmul.f32 %v1067, 1.442695
        %v1074 = vpow.pop %v1073
        %v1075 = vmul.f32 %v1068, 1.442695
        %v1076 = vpow.pop %v1075
        %v1077 = vsel %vm743, %v1070, 0.0
        %1078 = vadd.xlane.f32.xlu0 %v1077
        %v1079 = vpop.xlane.xlu0 %1078
        %v1080 = vsel %vm743, %v1072, 0.0
        %1081 = vadd.xlane.f32.xlu0 %v1080
        %v1082 = vpop.xlane.xlu0 %1081
        %v1083 = vsel %vm743, %v1074, 0.0
        %1084 = vadd.xlane.f32.xlu0 %v1083
        %v1085 = vpop.xlane.xlu0 %1084
        %v1086 = vsel %vm743, %v1076, 0.0
        %1087 = vadd.xlane.f32.xlu0 %v1086
        %v1088 = vpop.xlane.xlu0 %1087
        %v1089 = vrcp.pop %v1079
        %v1090 = vrcp.pop %v1082
        %v1091 = vrcp.pop %v1085
        %v1092 = vrcp.pop %v1088
        %v1093 = vmul.f32 %v1070, %v1089
        %v1094 = vmul.f32 %v1072, %v1090
        %v1095 = vmul.f32 %v1074, %v1091
        %v1096 = vmul.f32 %v1076, %v1092
        %1097 = vrot.lane.b32.xlu0 %v527, 112
        %v1098 = vpop.permute.xlu0 %1097
        %v1101 = vsel %vm743, %v1093, 0
        %1103 = vmatprep.subr.mxu0 0.0
        %1104 = vmatpush1.msra.mxu0 %v1098
        %1105 = vmatprep.subr.mxu0 0.0
        %1106 = vmatpush1.msra.mxu0 0.0
        %1107 = vmatprep.subr.mxu0 0.0
        %1108 = vmatpush1.msra.mxu0 0.0
        %1109 = vmatprep.subr.mxu0 0.0
        %1110 = vmatpush1.msra.mxu0 0.0
        %1111 = vmatprep.subr.mxu0 0.0
        %1112 = vmatpush1.msra.mxu0 0.0
        %1113 = vmatprep.subr.mxu0 0.0
        %1114 = vmatpush1.msra.mxu0 0.0
        %1115 = vmatprep.subr.mxu0 0.0
        %1116 = vmatpush1.msra.mxu0 0.0
        %1117 = vmatprep.subr.mxu0 0.0
        %1118 = vmatpush1.msra.mxu0 0.0
        %1119 = vmatprep.subr.mxu0 0.0
        %1120 = vmatpush1.msra.mxu0 0.0
        %1121 = vmatprep.subr.mxu0 0.0
        %1122 = vmatpush1.msra.mxu0 0.0
        %1123 = vmatprep.subr.mxu0 0.0
        %1124 = vmatpush1.msra.mxu0 0.0
        %1125 = vmatprep.subr.mxu0 0.0
        %1126 = vmatpush1.msra.mxu0 0.0
        %1127 = vmatprep.subr.mxu0 0.0
        %1128 = vmatpush1.msra.mxu0 0.0
        %1129 = vmatprep.subr.mxu0 0.0
        %1130 = vmatpush1.msra.mxu0 0.0
        %1131 = vmatprep.subr.mxu0 0.0
        %1132 = vmatpush1.msra.mxu0 0.0
        %1133 = vmatprep.subr.mxu0 0.0
        %1134 = vmatpush1.msra.mxu0 0.0
        %1135 = vmatprep.subr.mxu0 0.0
        %1136 = vmatpush1.msra.mxu0 0.0
        %1137 = vmatprep.subr.mxu0 0.0
        %1138 = vmatpush1.msra.mxu0 0.0
        %1139 = vmatprep.subr.mxu0 0.0
        %1140 = vmatpush1.msra.mxu0 0.0
        %1141 = vmatprep.subr.mxu0 0.0
        %1142 = vmatpush1.msra.mxu0 0.0
        %1143 = vmatprep.subr.mxu0 0.0
        %1144 = vmatpush1.msra.mxu0 0.0
        %1145 = vmatprep.subr.mxu0 0.0
        %1146 = vmatpush1.msra.mxu0 0.0
        %1147 = vmatprep.subr.mxu0 0.0
        %1148 = vmatpush1.msra.mxu0 0.0
        %1149 = vmatprep.subr.mxu0 0.0
        %1150 = vmatpush1.msra.mxu0 0.0
        %1151 = vmatprep.subr.mxu0 0.0
        %1152 = vmatpush1.msra.mxu0 0.0
        %1153 = vmatprep.subr.mxu0 0.0
        %1154 = vmatpush1.msra.mxu0 0.0
        %1155 = vmatprep.subr.mxu0 0.0
        %1156 = vmatpush1.msra.mxu0 0.0
        %1157 = vmatprep.subr.mxu0 0.0
        %1158 = vmatpush1.msra.mxu0 0.0
        %1159 = vmatprep.subr.mxu0 0.0
        %1160 = vmatpush1.msra.mxu0 0.0
        %1161 = vmatprep.subr.mxu0 0.0
        %1162 = vmatpush1.msra.mxu0 0.0
        %1163 = vmatprep.subr.mxu0 0.0
        %1164 = vmatpush1.msra.mxu0 0.0
        %1165 = vmatprep.subr.mxu0 0.0
        %1166 = vmatpush1.msra.mxu0 0.0
        %1167 = vmatprep.mubr.f32.mxu0 0.0
        %1168 = vmatmul.mubr.f32.gmra.mrb[0].mxu0 %v1101
        %v1169 = vpop.f32.mrb[0].mxu0
        %v1170 = vadd.f32 0.0, %v1169
        %v1171 = vpop.f32.mrb[0].mxu0
        %1172 = vdwg.mxu0
        %1173 = vrot.lane.b32.xlu0 %v597, 112
        %v1174 = vpop.permute.xlu0 %1173
        %v1177 = vsel %vm743, %v1094, 0
        %1179 = vmatprep.subr.mxu0 0.0
        %1180 = vmatpush1.msra.mxu0 %v1174
        %1181 = vmatprep.subr.mxu0 0.0
        %1182 = vmatpush1.msra.mxu0 0.0
        %1183 = vmatprep.subr.mxu0 0.0
        %1184 = vmatpush1.msra.mxu0 0.0
        %1185 = vmatprep.subr.mxu0 0.0
        %1186 = vmatpush1.msra.mxu0 0.0
        %1187 = vmatprep.subr.mxu0 0.0
        %1188 = vmatpush1.msra.mxu0 0.0
        %1189 = vmatprep.subr.mxu0 0.0
        %1190 = vmatpush1.msra.mxu0 0.0
        %1191 = vmatprep.subr.mxu0 0.0
        %1192 = vmatpush1.msra.mxu0 0.0
        %1193 = vmatprep.subr.mxu0 0.0
        %1194 = vmatpush1.msra.mxu0 0.0
        %1195 = vmatprep.subr.mxu0 0.0
        %1196 = vmatpush1.msra.mxu0 0.0
        %1197 = vmatprep.subr.mxu0 0.0
        %1198 = vmatpush1.msra.mxu0 0.0
        %1199 = vmatprep.subr.mxu0 0.0
        %1200 = vmatpush1.msra.mxu0 0.0
        %1201 = vmatprep.subr.mxu0 0.0
        %1202 = vmatpush1.msra.mxu0 0.0
        %1203 = vmatprep.subr.mxu0 0.0
        %1204 = vmatpush1.msra.mxu0 0.0
        %1205 = vmatprep.subr.mxu0 0.0
        %1206 = vmatpush1.msra.mxu0 0.0
        %1207 = vmatprep.subr.mxu0 0.0
        %1208 = vmatpush1.msra.mxu0 0.0
        %1209 = vmatprep.subr.mxu0 0.0
        %1210 = vmatpush1.msra.mxu0 0.0
        %1211 = vmatprep.subr.mxu0 0.0
        %1212 = vmatpush1.msra.mxu0 0.0
        %1213 = vmatprep.subr.mxu0 0.0
        %1214 = vmatpush1.msra.mxu0 0.0
        %1215 = vmatprep.subr.mxu0 0.0
        %1216 = vmatpush1.msra.mxu0 0.0
        %1217 = vmatprep.subr.mxu0 0.0
        %1218 = vmatpush1.msra.mxu0 0.0
        %1219 = vmatprep.subr.mxu0 0.0
        %1220 = vmatpush1.msra.mxu0 0.0
        %1221 = vmatprep.subr.mxu0 0.0
        %1222 = vmatpush1.msra.mxu0 0.0
        %1223 = vmatprep.subr.mxu0 0.0
        %1224 = vmatpush1.msra.mxu0 0.0
        %1225 = vmatprep.subr.mxu0 0.0
        %1226 = vmatpush1.msra.mxu0 0.0
        %1227 = vmatprep.subr.mxu0 0.0
        %1228 = vmatpush1.msra.mxu0 0.0
        %1229 = vmatprep.subr.mxu0 0.0
        %1230 = vmatpush1.msra.mxu0 0.0
        %1231 = vmatprep.subr.mxu0 0.0
        %1232 = vmatpush1.msra.mxu0 0.0
        %1233 = vmatprep.subr.mxu0 0.0
        %1234 = vmatpush1.msra.mxu0 0.0
        %1235 = vmatprep.subr.mxu0 0.0
        %1236 = vmatpush1.msra.mxu0 0.0
        %1237 = vmatprep.subr.mxu0 0.0
        %1238 = vmatpush1.msra.mxu0 0.0
        %1239 = vmatprep.subr.mxu0 0.0
        %1240 = vmatpush1.msra.mxu0 0.0
        %1241 = vmatprep.subr.mxu0 0.0
        %1242 = vmatpush1.msra.mxu0 0.0
        %1243 = vmatprep.mubr.f32.mxu0 0.0
        %1244 = vmatmul.mubr.f32.gmra.mrb[0].mxu0 %v1177
        %v1245 = vpop.f32.mrb[0].mxu0
        %v1246 = vadd.f32 0.0, %v1245
        %v1247 = vpop.f32.mrb[0].mxu0
        %1248 = vdwg.mxu0
        %1249 = vrot.lane.b32.xlu0 %v667, 112
        %v1250 = vpop.permute.xlu0 %1249
        %v1253 = vsel %vm743, %v1095, 0
        %1255 = vmatprep.subr.mxu0 0.0
        %1256 = vmatpush1.msra.mxu0 %v1250
        %1257 = vmatprep.subr.mxu0 0.0
        %1258 = vmatpush1.msra.mxu0 0.0
        %1259 = vmatprep.subr.mxu0 0.0
        %1260 = vmatpush1.msra.mxu0 0.0
        %1261 = vmatprep.subr.mxu0 0.0
        %1262 = vmatpush1.msra.mxu0 0.0
        %1263 = vmatprep.subr.mxu0 0.0
        %1264 = vmatpush1.msra.mxu0 0.0
        %1265 = vmatprep.subr.mxu0 0.0
        %1266 = vmatpush1.msra.mxu0 0.0
        %1267 = vmatprep.subr.mxu0 0.0
        %1268 = vmatpush1.msra.mxu0 0.0
        %1269 = vmatprep.subr.mxu0 0.0
        %1270 = vmatpush1.msra.mxu0 0.0
        %1271 = vmatprep.subr.mxu0 0.0
        %1272 = vmatpush1.msra.mxu0 0.0
        %1273 = vmatprep.subr.mxu0 0.0
        %1274 = vmatpush1.msra.mxu0 0.0
        %1275 = vmatprep.subr.mxu0 0.0
        %1276 = vmatpush1.msra.mxu0 0.0
        %1277 = vmatprep.subr.mxu0 0.0
        %1278 = vmatpush1.msra.mxu0 0.0
        %1279 = vmatprep.subr.mxu0 0.0
        %1280 = vmatpush1.msra.mxu0 0.0
        %1281 = vmatprep.subr.mxu0 0.0
        %1282 = vmatpush1.msra.mxu0 0.0
        %1283 = vmatprep.subr.mxu0 0.0
        %1284 = vmatpush1.msra.mxu0 0.0
        %1285 = vmatprep.subr.mxu0 0.0
        %1286 = vmatpush1.msra.mxu0 0.0
        %1287 = vmatprep.subr.mxu0 0.0
        %1288 = vmatpush1.msra.mxu0 0.0
        %1289 = vmatprep.subr.mxu0 0.0
        %1290 = vmatpush1.msra.mxu0 0.0
        %1291 = vmatprep.subr.mxu0 0.0
        %1292 = vmatpush1.msra.mxu0 0.0
        %1293 = vmatprep.subr.mxu0 0.0
        %1294 = vmatpush1.msra.mxu0 0.0
        %1295 = vmatprep.subr.mxu0 0.0
        %1296 = vmatpush1.msra.mxu0 0.0
        %1297 = vmatprep.subr.mxu0 0.0
        %1298 = vmatpush1.msra.mxu0 0.0
        %1299 = vmatprep.subr.mxu0 0.0
        %1300 = vmatpush1.msra.mxu0 0.0
        %1301 = vmatprep.subr.mxu0 0.0
        %1302 = vmatpush1.msra.mxu0 0.0
        %1303 = vmatprep.subr.mxu0 0.0
        %1304 = vmatpush1.msra.mxu0 0.0
        %1305 = vmatprep.subr.mxu0 0.0
        %1306 = vmatpush1.msra.mxu0 0.0
        %1307 = vmatprep.subr.mxu0 0.0
        %1308 = vmatpush1.msra.mxu0 0.0
        %1309 = vmatprep.subr.mxu0 0.0
        %1310 = vmatpush1.msra.mxu0 0.0
        %1311 = vmatprep.subr.mxu0 0.0
        %1312 = vmatpush1.msra.mxu0 0.0
        %1313 = vmatprep.subr.mxu0 0.0
        %1314 = vmatpush1.msra.mxu0 0.0
        %1315 = vmatprep.subr.mxu0 0.0
        %1316 = vmatpush1.msra.mxu0 0.0
        %1317 = vmatprep.subr.mxu0 0.0
        %1318 = vmatpush1.msra.mxu0 0.0
        %1319 = vmatprep.mubr.f32.mxu0 0.0
        %1320 = vmatmul.mubr.f32.gmra.mrb[0].mxu0 %v1253
        %v1321 = vpop.f32.mrb[0].mxu0
        %v1322 = vadd.f32 0.0, %v1321
        %v1323 = vpop.f32.mrb[0].mxu0
        %1324 = vdwg.mxu0
        %1325 = vrot.lane.b32.xlu0 %v737, 112
        %v1326 = vpop.permute.xlu0 %1325
        %v1329 = vsel %vm743, %v1096, 0
        %1331 = vmatprep.subr.mxu0 0.0
        %1332 = vmatpush1.msra.mxu0 %v1326
        %1333 = vmatprep.subr.mxu0 0.0
        %1334 = vmatpush1.msra.mxu0 0.0
        %1335 = vmatprep.subr.mxu0 0.0
        %1336 = vmatpush1.msra.mxu0 0.0
        %1337 = vmatprep.subr.mxu0 0.0
        %1338 = vmatpush1.msra.mxu0 0.0
        %1339 = vmatprep.subr.mxu0 0.0
        %1340 = vmatpush1.msra.mxu0 0.0
        %1341 = vmatprep.subr.mxu0 0.0
        %1342 = vmatpush1.msra.mxu0 0.0
        %1343 = vmatprep.subr.mxu0 0.0
        %1344 = vmatpush1.msra.mxu0 0.0
        %1345 = vmatprep.subr.mxu0 0.0
        %1346 = vmatpush1.msra.mxu0 0.0
        %1347 = vmatprep.subr.mxu0 0.0
        %1348 = vmatpush1.msra.mxu0 0.0
        %1349 = vmatprep.subr.mxu0 0.0
        %1350 = vmatpush1.msra.mxu0 0.0
        %1351 = vmatprep.subr.mxu0 0.0
        %1352 = vmatpush1.msra.mxu0 0.0
        %1353 = vmatprep.subr.mxu0 0.0
        %1354 = vmatpush1.msra.mxu0 0.0
        %1355 = vmatprep.subr.mxu0 0.0
        %1356 = vmatpush1.msra.mxu0 0.0
        %1357 = vmatprep.subr.mxu0 0.0
        %1358 = vmatpush1.msra.mxu0 0.0
        %1359 = vmatprep.subr.mxu0 0.0
        %1360 = vmatpush1.msra.mxu0 0.0
        %1361 = vmatprep.subr.mxu0 0.0
        %1362 = vmatpush1.msra.mxu0 0.0
        %1363 = vmatprep.subr.mxu0 0.0
        %1364 = vmatpush1.msra.mxu0 0.0
        %1365 = vmatprep.subr.mxu0 0.0
        %1366 = vmatpush1.msra.mxu0 0.0
        %1367 = vmatprep.subr.mxu0 0.0
        %1368 = vmatpush1.msra.mxu0 0.0
        %1369 = vmatprep.subr.mxu0 0.0
        %1370 = vmatpush1.msra.mxu0 0.0
        %1371 = vmatprep.subr.mxu0 0.0
        %1372 = vmatpush1.msra.mxu0 0.0
        %1373 = vmatprep.subr.mxu0 0.0
        %1374 = vmatpush1.msra.mxu0 0.0
        %1375 = vmatprep.subr.mxu0 0.0
        %1376 = vmatpush1.msra.mxu0 0.0
        %1377 = vmatprep.subr.mxu0 0.0
        %1378 = vmatpush1.msra.mxu0 0.0
        %1379 = vmatprep.subr.mxu0 0.0
        %1380 = vmatpush1.msra.mxu0 0.0
        %1381 = vmatprep.subr.mxu0 0.0
        %1382 = vmatpush1.msra.mxu0 0.0
        %1383 = vmatprep.subr.mxu0 0.0
        %1384 = vmatpush1.msra.mxu0 0.0
        %1385 = vmatprep.subr.mxu0 0.0
        %1386 = vmatpush1.msra.mxu0 0.0
        %1387 = vmatprep.subr.mxu0 0.0
        %1388 = vmatpush1.msra.mxu0 0.0
        %1389 = vmatprep.subr.mxu0 0.0
        %1390 = vmatpush1.msra.mxu0 0.0
        %1391 = vmatprep.subr.mxu0 0.0
        %1392 = vmatpush1.msra.mxu0 0.0
        %1393 = vmatprep.subr.mxu0 0.0
        %1394 = vmatpush1.msra.mxu0 0.0
        %1395 = vmatprep.mubr.f32.mxu0 0.0
        %1396 = vmatmul.mubr.f32.gmra.mrb[0].mxu0 %v1329
        %v1397 = vpop.f32.mrb[0].mxu0
        %v1398 = vadd.f32 0.0, %v1397
        %v1399 = vpop.f32.mrb[0].mxu0
        %1400 = vdwg.mxu0
        %v1401 = vld [vmem:[%s4] sm:$0xff]
        %v1402 = vld [vmem:[%s4 + $0x8] sm:$0xff]
        %v1403 = vld [vmem:[%s4 + $0x10] sm:$0xff]
        %v1404 = vld [vmem:[%s4 + $0x18] sm:$0xff]
        %v1406 = vsel %vm743, %v1170, 0
        %1408 = vmatprep.subr.mxu0 0.0
        %1409 = vmatpush1.msra.mxu0 %v1401
        %1410 = vmatprep.subr.mxu0 0.0
        %1411 = vmatpush1.msra.mxu0 0.0
        %1412 = vmatprep.subr.mxu0 0.0
        %1413 = vmatpush1.msra.mxu0 0.0
        %1414 = vmatprep.subr.mxu0 0.0
        %1415 = vmatpush1.msra.mxu0 0.0
        %1416 = vmatprep.subr.mxu0 0.0
        %1417 = vmatpush1.msra.mxu0 0.0
        %1418 = vmatprep.subr.mxu0 0.0
        %1419 = vmatpush1.msra.mxu0 0.0
        %1420 = vmatprep.subr.mxu0 0.0
        %1421 = vmatpush1.msra.mxu0 0.0
        %1422 = vmatprep.subr.mxu0 0.0
        %1423 = vmatpush1.msra.mxu0 0.0
        %1424 = vmatprep.subr.mxu0 0.0
        %1425 = vmatpush1.msra.mxu0 0.0
        %1426 = vmatprep.subr.mxu0 0.0
        %1427 = vmatpush1.msra.mxu0 0.0
        %1428 = vmatprep.subr.mxu0 0.0
        %1429 = vmatpush1.msra.mxu0 0.0
        %1430 = vmatprep.subr.mxu0 0.0
        %1431 = vmatpush1.msra.mxu0 0.0
        %1432 = vmatprep.subr.mxu0 0.0
        %1433 = vmatpush1.msra.mxu0 0.0
        %1434 = vmatprep.subr.mxu0 0.0
        %1435 = vmatpush1.msra.mxu0 0.0
        %1436 = vmatprep.subr.mxu0 0.0
        %1437 = vmatpush1.msra.mxu0 0.0
        %1438 = vmatprep.subr.mxu0 0.0
        %1439 = vmatpush1.msra.mxu0 0.0
        %1440 = vmatprep.subr.mxu0 0.0
        %1441 = vmatpush1.msra.mxu0 0.0
        %1442 = vmatprep.subr.mxu0 0.0
        %1443 = vmatpush1.msra.mxu0 0.0
        %1444 = vmatprep.subr.mxu0 0.0
        %1445 = vmatpush1.msra.mxu0 0.0
        %1446 = vmatprep.subr.mxu0 0.0
        %1447 = vmatpush1.msra.mxu0 0.0
        %1448 = vmatprep.subr.mxu0 0.0
        %1449 = vmatpush1.msra.mxu0 0.0
        %1450 = vmatprep.subr.mxu0 0.0
        %1451 = vmatpush1.msra.mxu0 0.0
        %1452 = vmatprep.subr.mxu0 0.0
        %1453 = vmatpush1.msra.mxu0 0.0
        %1454 = vmatprep.subr.mxu0 0.0
        %1455 = vmatpush1.msra.mxu0 0.0
        %1456 = vmatprep.subr.mxu0 0.0
        %1457 = vmatpush1.msra.mxu0 0.0
        %1458 = vmatprep.subr.mxu0 0.0
        %1459 = vmatpush1.msra.mxu0 0.0
        %1460 = vmatprep.subr.mxu0 0.0
        %1461 = vmatpush1.msra.mxu0 0.0
        %1462 = vmatprep.subr.mxu0 0.0
        %1463 = vmatpush1.msra.mxu0 0.0
        %1464 = vmatprep.subr.mxu0 0.0
        %1465 = vmatpush1.msra.mxu0 0.0
        %1466 = vmatprep.subr.mxu0 0.0
        %1467 = vmatpush1.msra.mxu0 0.0
        %1468 = vmatprep.subr.mxu0 0.0
        %1469 = vmatpush1.msra.mxu0 0.0
        %1470 = vmatprep.subr.mxu0 0.0
        %1471 = vmatpush1.msra.mxu0 0.0
        %1472 = vmatprep.mubr.f32.mxu0 0.0
        %1473 = vmatmul.mubr.f32.gmra.mrb[0].mxu0 %v1406
        %v1474 = vpop.f32.mrb[0].mxu0
        %v1475 = vadd.f32 0.0, %v1474
        %v1476 = vpop.f32.mrb[0].mxu0
        %1477 = vdwg.mxu0
        %v1479 = vsel %vm743, %v1246, 0
        %1481 = vmatprep.subr.mxu0 0.0
        %1482 = vmatpush1.msra.mxu0 %v1402
        %1483 = vmatprep.subr.mxu0 0.0
        %1484 = vmatpush1.msra.mxu0 0.0
        %1485 = vmatprep.subr.mxu0 0.0
        %1486 = vmatpush1.msra.mxu0 0.0
        %1487 = vmatprep.subr.mxu0 0.0
        %1488 = vmatpush1.msra.mxu0 0.0
        %1489 = vmatprep.subr.mxu0 0.0
        %1490 = vmatpush1.msra.mxu0 0.0
        %1491 = vmatprep.subr.mxu0 0.0
        %1492 = vmatpush1.msra.mxu0 0.0
        %1493 = vmatprep.subr.mxu0 0.0
        %1494 = vmatpush1.msra.mxu0 0.0
        %1495 = vmatprep.subr.mxu0 0.0
        %1496 = vmatpush1.msra.mxu0 0.0
        %1497 = vmatprep.subr.mxu0 0.0
        %1498 = vmatpush1.msra.mxu0 0.0
        %1499 = vmatprep.subr.mxu0 0.0
        %1500 = vmatpush1.msra.mxu0 0.0
        %1501 = vmatprep.subr.mxu0 0.0
        %1502 = vmatpush1.msra.mxu0 0.0
        %1503 = vmatprep.subr.mxu0 0.0
        %1504 = vmatpush1.msra.mxu0 0.0
        %1505 = vmatprep.subr.mxu0 0.0
        %1506 = vmatpush1.msra.mxu0 0.0
        %1507 = vmatprep.subr.mxu0 0.0
        %1508 = vmatpush1.msra.mxu0 0.0
        %1509 = vmatprep.subr.mxu0 0.0
        %1510 = vmatpush1.msra.mxu0 0.0
        %1511 = vmatprep.subr.mxu0 0.0
        %1512 = vmatpush1.msra.mxu0 0.0
        %1513 = vmatprep.subr.mxu0 0.0
        %1514 = vmatpush1.msra.mxu0 0.0
        %1515 = vmatprep.subr.mxu0 0.0
        %1516 = vmatpush1.msra.mxu0 0.0
        %1517 = vmatprep.subr.mxu0 0.0
        %1518 = vmatpush1.msra.mxu0 0.0
        %1519 = vmatprep.subr.mxu0 0.0
        %1520 = vmatpush1.msra.mxu0 0.0
        %1521 = vmatprep.subr.mxu0 0.0
        %1522 = vmatpush1.msra.mxu0 0.0
        %1523 = vmatprep.subr.mxu0 0.0
        %1524 = vmatpush1.msra.mxu0 0.0
        %1525 = vmatprep.subr.mxu0 0.0
        %1526 = vmatpush1.msra.mxu0 0.0
        %1527 = vmatprep.subr.mxu0 0.0
        %1528 = vmatpush1.msra.mxu0 0.0
        %1529 = vmatprep.subr.mxu0 0.0
        %1530 = vmatpush1.msra.mxu0 0.0
        %1531 = vmatprep.subr.mxu0 0.0
        %1532 = vmatpush1.msra.mxu0 0.0
        %1533 = vmatprep.subr.mxu0 0.0
        %1534 = vmatpush1.msra.mxu0 0.0
        %1535 = vmatprep.subr.mxu0 0.0
        %1536 = vmatpush1.msra.mxu0 0.0
        %1537 = vmatprep.subr.mxu0 0.0
        %1538 = vmatpush1.msra.mxu0 0.0
        %1539 = vmatprep.subr.mxu0 0.0
        %1540 = vmatpush1.msra.mxu0 0.0
        %1541 = vmatprep.subr.mxu0 0.0
        %1542 = vmatpush1.msra.mxu0 0.0
        %1543 = vmatprep.subr.mxu0 0.0
        %1544 = vmatpush1.msra.mxu0 0.0
        %1545 = vmatprep.mubr.f32.mxu0 0.0
        %1546 = vmatmul.mubr.f32.gmra.mrb[0].mxu0 %v1479
        %v1547 = vpop.f32.mrb[0].mxu0
        %v1548 = vadd.f32 0.0, %v1547
        %v1549 = vpop.f32.mrb[0].mxu0
        %1550 = vdwg.mxu0
        %v1552 = vsel %vm743, %v1322, 0
        %1554 = vmatprep.subr.mxu0 0.0
        %1555 = vmatpush1.msra.mxu0 %v1403
        %1556 = vmatprep.subr.mxu0 0.0
        %1557 = vmatpush1.msra.mxu0 0.0
        %1558 = vmatprep.subr.mxu0 0.0
        %1559 = vmatpush1.msra.mxu0 0.0
        %1560 = vmatprep.subr.mxu0 0.0
        %1561 = vmatpush1.msra.mxu0 0.0
        %1562 = vmatprep.subr.mxu0 0.0
        %1563 = vmatpush1.msra.mxu0 0.0
        %1564 = vmatprep.subr.mxu0 0.0
        %1565 = vmatpush1.msra.mxu0 0.0
        %1566 = vmatprep.subr.mxu0 0.0
        %1567 = vmatpush1.msra.mxu0 0.0
        %1568 = vmatprep.subr.mxu0 0.0
        %1569 = vmatpush1.msra.mxu0 0.0
        %1570 = vmatprep.subr.mxu0 0.0
        %1571 = vmatpush1.msra.mxu0 0.0
        %1572 = vmatprep.subr.mxu0 0.0
        %1573 = vmatpush1.msra.mxu0 0.0
        %1574 = vmatprep.subr.mxu0 0.0
        %1575 = vmatpush1.msra.mxu0 0.0
        %1576 = vmatprep.subr.mxu0 0.0
        %1577 = vmatpush1.msra.mxu0 0.0
        %1578 = vmatprep.subr.mxu0 0.0
        %1579 = vmatpush1.msra.mxu0 0.0
        %1580 = vmatprep.subr.mxu0 0.0
        %1581 = vmatpush1.msra.mxu0 0.0
        %1582 = vmatprep.subr.mxu0 0.0
        %1583 = vmatpush1.msra.mxu0 0.0
        %1584 = vmatprep.subr.mxu0 0.0
        %1585 = vmatpush1.msra.mxu0 0.0
        %1586 = vmatprep.subr.mxu0 0.0
        %1587 = vmatpush1.msra.mxu0 0.0
        %1588 = vmatprep.subr.mxu0 0.0
        %1589 = vmatpush1.msra.mxu0 0.0
        %1590 = vmatprep.subr.mxu0 0.0
        %1591 = vmatpush1.msra.mxu0 0.0
        %1592 = vmatprep.subr.mxu0 0.0
        %1593 = vmatpush1.msra.mxu0 0.0
        %1594 = vmatprep.subr.mxu0 0.0
        %1595 = vmatpush1.msra.mxu0 0.0
        %1596 = vmatprep.subr.mxu0 0.0
        %1597 = vmatpush1.msra.mxu0 0.0
        %1598 = vmatprep.subr.mxu0 0.0
        %1599 = vmatpush1.msra.mxu0 0.0
        %1600 = vmatprep.subr.mxu0 0.0
        %1601 = vmatpush1.msra.mxu0 0.0
        %1602 = vmatprep.subr.mxu0 0.0
        %1603 = vmatpush1.msra.mxu0 0.0
        %1604 = vmatprep.subr.mxu0 0.0
        %1605 = vmatpush1.msra.mxu0 0.0
        %1606 = vmatprep.subr.mxu0 0.0
        %1607 = vmatpush1.msra.mxu0 0.0
        %1608 = vmatprep.subr.mxu0 0.0
        %1609 = vmatpush1.msra.mxu0 0.0
        %1610 = vmatprep.subr.mxu0 0.0
        %1611 = vmatpush1.msra.mxu0 0.0
        %1612 = vmatprep.subr.mxu0 0.0
        %1613 = vmatpush1.msra.mxu0 0.0
        %1614 = vmatprep.subr.mxu0 0.0
        %1615 = vmatpush1.msra.mxu0 0.0
        %1616 = vmatprep.subr.mxu0 0.0
        %1617 = vmatpush1.msra.mxu0 0.0
        %1618 = vmatprep.mubr.f32.mxu0 0.0
        %1619 = vmatmul.mubr.f32.gmra.mrb[0].mxu0 %v1552
        %v1620 = vpop.f32.mrb[0].mxu0
        %v1621 = vadd.f32 0.0, %v1620
        %v1622 = vpop.f32.mrb[0].mxu0
        %1623 = vdwg.mxu0
        %v1625 = vsel %vm743, %v1398, 0
        %1627 = vmatprep.subr.mxu0 0.0
        %1628 = vmatpush1.msra.mxu0 %v1404
        %1629 = vmatprep.subr.mxu0 0.0
        %1630 = vmatpush1.msra.mxu0 0.0
        %1631 = vmatprep.subr.mxu0 0.0
        %1632 = vmatpush1.msra.mxu0 0.0
        %1633 = vmatprep.subr.mxu0 0.0
        %1634 = vmatpush1.msra.mxu0 0.0
        %1635 = vmatprep.subr.mxu0 0.0
        %1636 = vmatpush1.msra.mxu0 0.0
        %1637 = vmatprep.subr.mxu0 0.0
        %1638 = vmatpush1.msra.mxu0 0.0
        %1639 = vmatprep.subr.mxu0 0.0
        %1640 = vmatpush1.msra.mxu0 0.0
        %1641 = vmatprep.subr.mxu0 0.0
        %1642 = vmatpush1.msra.mxu0 0.0
        %1643 = vmatprep.subr.mxu0 0.0
        %1644 = vmatpush1.msra.mxu0 0.0
        %1645 = vmatprep.subr.mxu0 0.0
        %1646 = vmatpush1.msra.mxu0 0.0
        %1647 = vmatprep.subr.mxu0 0.0
        %1648 = vmatpush1.msra.mxu0 0.0
        %1649 = vmatprep.subr.mxu0 0.0
        %1650 = vmatpush1.msra.mxu0 0.0
        %1651 = vmatprep.subr.mxu0 0.0
        %1652 = vmatpush1.msra.mxu0 0.0
        %1653 = vmatprep.subr.mxu0 0.0
        %1654 = vmatpush1.msra.mxu0 0.0
        %1655 = vmatprep.subr.mxu0 0.0
        %1656 = vmatpush1.msra.mxu0 0.0
        %1657 = vmatprep.subr.mxu0 0.0
        %1658 = vmatpush1.msra.mxu0 0.0
        %1659 = vmatprep.subr.mxu0 0.0
        %1660 = vmatpush1.msra.mxu0 0.0
        %1661 = vmatprep.subr.mxu0 0.0
        %1662 = vmatpush1.msra.mxu0 0.0
        %1663 = vmatprep.subr.mxu0 0.0
        %1664 = vmatpush1.msra.mxu0 0.0
        %1665 = vmatprep.subr.mxu0 0.0
        %1666 = vmatpush1.msra.mxu0 0.0
        %1667 = vmatprep.subr.mxu0 0.0
        %1668 = vmatpush1.msra.mxu0 0.0
        %1669 = vmatprep.subr.mxu0 0.0
        %1670 = vmatpush1.msra.mxu0 0.0
        %1671 = vmatprep.subr.mxu0 0.0
        %1672 = vmatpush1.msra.mxu0 0.0
        %1673 = vmatprep.subr.mxu0 0.0
        %1674 = vmatpush1.msra.mxu0 0.0
        %1675 = vmatprep.subr.mxu0 0.0
        %1676 = vmatpush1.msra.mxu0 0.0
        %1677 = vmatprep.subr.mxu0 0.0
        %1678 = vmatpush1.msra.mxu0 0.0
        %1679 = vmatprep.subr.mxu0 0.0
        %1680 = vmatpush1.msra.mxu0 0.0
        %1681 = vmatprep.subr.mxu0 0.0
        %1682 = vmatpush1.msra.mxu0 0.0
        %1683 = vmatprep.subr.mxu0 0.0
        %1684 = vmatpush1.msra.mxu0 0.0
        %1685 = vmatprep.subr.mxu0 0.0
        %1686 = vmatpush1.msra.mxu0 0.0
        %1687 = vmatprep.subr.mxu0 0.0
        %1688 = vmatpush1.msra.mxu0 0.0
        %1689 = vmatprep.subr.mxu0 0.0
        %1690 = vmatpush1.msra.mxu0 0.0
        %1691 = vmatprep.mubr.f32.mxu0 0.0
        %1692 = vmatmul.mubr.f32.gmra.mrb[0].mxu0 %v1625
        %v1693 = vpop.f32.mrb[0].mxu0
        %v1694 = vadd.f32 0.0, %v1693
        %v1695 = vpop.f32.mrb[0].mxu0
        %1696 = vdwg.mxu0
        %v1697 = vadd.f32 %v1475, %v1548
        %v1698 = vadd.f32 %v1697, %v1621
        %v1699 = vadd.f32 %v1698, %v1694
        %v1700 = vld [vmem:[%s5] sm:$0x1]
        %v1702 = vlaneseq
        %v1703 = vshrl.u32 %v1702, 7
        %v1704 = vsub.s32 0, %v1703
        %v1705 = vrot.slane %v1700, %v1704
        %v1707 = vadd.f32 %v1699, %v1705
        %v1708 = vadd.f32 %v409, %v1707
        %v1709 = vld [vmem:[%s6] sm:$0x1]
        %v1710 = vld [vmem:[%s7] sm:$0x1]
        %v1711 = vsel %vm412, %v1708, 0.0
        %1712 = vadd.xlane.f32.xlu0 %v1711
        %v1713 = vpop.xlane.xlu0 %1712
        %v1714 = vmul.f32 %v1713, %v416
        %v1715 = vsub.f32 %v1708, %v1714
        %v1716 = vmul.f32 %v1715, %v1715
        %v1717 = vsel %vm412, %v1716, 0.0
        %1718 = vadd.xlane.f32.xlu0 %v1717
        %v1719 = vpop.xlane.xlu0 %1718
        %v1720 = vmul.f32 %v1719, %v416
        %v1721 = vadd.f32 %v1720, 1e-05
        %v1722 = vrsqrt.pop %v1721
        %v1723 = vmul.f32 %v1715, %v1722
        %v1725 = vlaneseq
        %v1726 = vshrl.u32 %v1725, 7
        %v1727 = vsub.s32 0, %v1726
        %v1728 = vrot.slane %v1709, %v1727
        %v1730 = vmul.f32 %v1723, %v1728
        %v1732 = vlaneseq
        %v1733 = vshrl.u32 %v1732, 7
        %v1734 = vsub.s32 0, %v1733
        %v1735 = vrot.slane %v1710, %v1734
        %v1737 = vadd.f32 %v1730, %v1735
        %v1738 = vld [vmem:[%s8] sm:$0xff]
        %v1739 = vld [vmem:[%s8 + $0x8] sm:$0xff]
        %v1740 = vld [vmem:[%s8 + $0x10] sm:$0xff]
        %v1741 = vld [vmem:[%s8 + $0x18] sm:$0xff]
        %v1742 = vld [vmem:[%s9] sm:$0x1]
        %v1744 = vlaneseq
        %v1745 = vshrl.u32 %v1744, 7
        %v1746 = vsub.s32 0, %v1745
        %v1747 = vrot.slane %v1742, %v1746
        %v1750 = vsel %vm412, %v1737, 0
        %1752 = vmatprep.subr.mxu0 0.0
        %1753 = vmatpush1.msra.mxu0 %v1738
        %1754 = vmatprep.subr.mxu0 0.0
        %1755 = vmatpush1.msra.mxu0 %v1739
        %1756 = vmatprep.subr.mxu0 0.0
        %1757 = vmatpush1.msra.mxu0 %v1740
        %1758 = vmatprep.subr.mxu0 0.0
        %1759 = vmatpush1.msra.mxu0 %v1741
        %1760 = vmatprep.subr.mxu0 0.0
        %1761 = vmatpush1.msra.mxu0 0.0
        %1762 = vmatprep.subr.mxu0 0.0
        %1763 = vmatpush1.msra.mxu0 0.0
        %1764 = vmatprep.subr.mxu0 0.0
        %1765 = vmatpush1.msra.mxu0 0.0
        %1766 = vmatprep.subr.mxu0 0.0
        %1767 = vmatpush1.msra.mxu0 0.0
        %1768 = vmatprep.subr.mxu0 0.0
        %1769 = vmatpush1.msra.mxu0 0.0
        %1770 = vmatprep.subr.mxu0 0.0
        %1771 = vmatpush1.msra.mxu0 0.0
        %1772 = vmatprep.subr.mxu0 0.0
        %1773 = vmatpush1.msra.mxu0 0.0
        %1774 = vmatprep.subr.mxu0 0.0
        %1775 = vmatpush1.msra.mxu0 0.0
        %1776 = vmatprep.subr.mxu0 0.0
        %1777 = vmatpush1.msra.mxu0 0.0
        %1778 = vmatprep.subr.mxu0 0.0
        %1779 = vmatpush1.msra.mxu0 0.0
        %1780 = vmatprep.subr.mxu0 0.0
        %1781 = vmatpush1.msra.mxu0 0.0
        %1782 = vmatprep.subr.mxu0 0.0
        %1783 = vmatpush1.msra.mxu0 0.0
        %1784 = vmatprep.subr.mxu0 0.0
        %1785 = vmatpush1.msra.mxu0 0.0
        %1786 = vmatprep.subr.mxu0 0.0
        %1787 = vmatpush1.msra.mxu0 0.0
        %1788 = vmatprep.subr.mxu0 0.0
        %1789 = vmatpush1.msra.mxu0 0.0
        %1790 = vmatprep.subr.mxu0 0.0
        %1791 = vmatpush1.msra.mxu0 0.0
        %1792 = vmatprep.subr.mxu0 0.0
        %1793 = vmatpush1.msra.mxu0 0.0
        %1794 = vmatprep.subr.mxu0 0.0
        %1795 = vmatpush1.msra.mxu0 0.0
        %1796 = vmatprep.subr.mxu0 0.0
        %1797 = vmatpush1.msra.mxu0 0.0
        %1798 = vmatprep.subr.mxu0 0.0
        %1799 = vmatpush1.msra.mxu0 0.0
        %1800 = vmatprep.subr.mxu0 0.0
        %1801 = vmatpush1.msra.mxu0 0.0
        %1802 = vmatprep.subr.mxu0 0.0
        %1803 = vmatpush1.msra.mxu0 0.0
        %1804 = vmatprep.subr.mxu0 0.0
        %1805 = vmatpush1.msra.mxu0 0.0
        %1806 = vmatprep.subr.mxu0 0.0
        %1807 = vmatpush1.msra.mxu0 0.0
        %1808 = vmatprep.subr.mxu0 0.0
        %1809 = vmatpush1.msra.mxu0 0.0
        %1810 = vmatprep.subr.mxu0 0.0
        %1811 = vmatpush1.msra.mxu0 0.0
        %1812 = vmatprep.subr.mxu0 0.0
        %1813 = vmatpush1.msra.mxu0 0.0
        %1814 = vmatprep.subr.mxu0 0.0
        %1815 = vmatpush1.msra.mxu0 0.0
        %1816 = vmatprep.mubr.f32.mxu0 0.0
        %1817 = vmatmul.mubr.f32.gmra.mrb[0].mxu0 %v1750
        %v1818 = vpop.f32.mrb[0].mxu0
        %v1819 = vadd.f32 %v1747, %v1818
        %v1820 = vpop.f32.mrb[0].mxu0
        %1821 = vdwg.mxu0
        %v1822 = vmul.f32 %v1819, 0.5
        %v1823 = vmul.f32 %v1819, 0.70710677
        %v1824 = verf.f32.pop %v1823
        %v1825 = vadd.f32 %v1824, 1.0
        %v1826 = vmul.f32 %v1822, %v1825
        %v1827 = vld [vmem:[%s10] sm:$0xff]
        %v1828 = vld [vmem:[%s10 + $0x8] sm:$0xff]
        %v1829 = vld [vmem:[%s10 + $0x10] sm:$0xff]
        %v1830 = vld [vmem:[%s10 + $0x18] sm:$0xff]
        %v1831 = vld [vmem:[%s10 + $0x20] sm:$0xff]
        %v1832 = vld [vmem:[%s10 + $0x28] sm:$0xff]
        %v1833 = vld [vmem:[%s10 + $0x30] sm:$0xff]
        %v1834 = vld [vmem:[%s10 + $0x38] sm:$0xff]
        %v1835 = vld [vmem:[%s10 + $0x40] sm:$0xff]
        %v1836 = vld [vmem:[%s10 + $0x48] sm:$0xff]
        %v1837 = vld [vmem:[%s10 + $0x50] sm:$0xff]
        %v1838 = vld [vmem:[%s10 + $0x58] sm:$0xff]
        %v1839 = vld [vmem:[%s10 + $0x60] sm:$0xff]
        %v1840 = vld [vmem:[%s10 + $0x68] sm:$0xff]
        %v1841 = vld [vmem:[%s10 + $0x70] sm:$0xff]
        %v1842 = vld [vmem:[%s10 + $0x78] sm:$0xff]
        %v1843 = vld [vmem:[%s11] sm:$0x1]
        %v1845 = vlaneseq
        %v1846 = vshrl.u32 %v1845, 7
        %v1847 = vsub.s32 0, %v1846
        %v1848 = vrot.slane %v1843, %v1847
        %1850 = vmatprep.subr.mxu0 0.0
        %1851 = vmatpush1.msra.mxu0 %v1827
        %1852 = vmatprep.subr.mxu0 0.0
        %1853 = vmatpush1.msra.mxu0 %v1828
        %1854 = vmatprep.subr.mxu0 0.0
        %1855 = vmatpush1.msra.mxu0 %v1829
        %1856 = vmatprep.subr.mxu0 0.0
        %1857 = vmatpush1.msra.mxu0 %v1830
        %1858 = vmatprep.subr.mxu0 0.0
        %1859 = vmatpush1.msra.mxu0 %v1831
        %1860 = vmatprep.subr.mxu0 0.0
        %1861 = vmatpush1.msra.mxu0 %v1832
        %1862 = vmatprep.subr.mxu0 0.0
        %1863 = vmatpush1.msra.mxu0 %v1833
        %1864 = vmatprep.subr.mxu0 0.0
        %1865 = vmatpush1.msra.mxu0 %v1834
        %1866 = vmatprep.subr.mxu0 0.0
        %1867 = vmatpush1.msra.mxu0 %v1835
        %1868 = vmatprep.subr.mxu0 0.0
        %1869 = vmatpush1.msra.mxu0 %v1836
        %1870 = vmatprep.subr.mxu0 0.0
        %1871 = vmatpush1.msra.mxu0 %v1837
        %1872 = vmatprep.subr.mxu0 0.0
        %1873 = vmatpush1.msra.mxu0 %v1838
        %1874 = vmatprep.subr.mxu0 0.0
        %1875 = vmatpush1.msra.mxu0 %v1839
        %1876 = vmatprep.subr.mxu0 0.0
        %1877 = vmatpush1.msra.mxu0 %v1840
        %1878 = vmatprep.subr.mxu0 0.0
        %1879 = vmatpush1.msra.mxu0 %v1841
        %1880 = vmatprep.subr.mxu0 0.0
        %1881 = vmatpush1.msra.mxu0 %v1842
        %1882 = vmatprep.subr.mxu0 0.0
        %1883 = vmatpush1.msra.mxu0 0.0
        %1884 = vmatprep.subr.mxu0 0.0
        %1885 = vmatpush1.msra.mxu0 0.0
        %1886 = vmatprep.subr.mxu0 0.0
        %1887 = vmatpush1.msra.mxu0 0.0
        %1888 = vmatprep.subr.mxu0 0.0
        %1889 = vmatpush1.msra.mxu0 0.0
        %1890 = vmatprep.subr.mxu0 0.0
        %1891 = vmatpush1.msra.mxu0 0.0
        %1892 = vmatprep.subr.mxu0 0.0
        %1893 = vmatpush1.msra.mxu0 0.0
        %1894 = vmatprep.subr.mxu0 0.0
        %1895 = vmatpush1.msra.mxu0 0.0
        %1896 = vmatprep.subr.mxu0 0.0
        %1897 = vmatpush1.msra.mxu0 0.0
        %1898 = vmatprep.subr.mxu0 0.0
        %1899 = vmatpush1.msra.mxu0 0.0
        %1900 = vmatprep.subr.mxu0 0.0
        %1901 = vmatpush1.msra.mxu0 0.0
        %1902 = vmatprep.subr.mxu0 0.0
        %1903 = vmatpush1.msra.mxu0 0.0
        %1904 = vmatprep.subr.mxu0 0.0
        %1905 = vmatpush1.msra.mxu0 0.0
        %1906 = vmatprep.subr.mxu0 0.0
        %1907 = vmatpush1.msra.mxu0 0.0
        %1908 = vmatprep.subr.mxu0 0.0
        %1909 = vmatpush1.msra.mxu0 0.0
        %1910 = vmatprep.subr.mxu0 0.0
        %1911 = vmatpush1.msra.mxu0 0.0
        %1912 = vmatprep.subr.mxu0 0.0
        %1913 = vmatpush1.msra.mxu0 0.0
        %1914 = vmatprep.mubr.f32.mxu0 0.0
        %1915 = vmatmul.mubr.f32.gmra.mrb[0].mxu0 %v1826
        %v1916 = vpop.f32.mrb[0].mxu0
        %v1917 = vadd.f32 %v1848, %v1916
        %v1918 = vpop.f32.mrb[0].mxu0
        %1919 = vdwg.mxu0
        %v1920 = vadd.f32 %v1708, %v1917
        %1921 = vst.msk [vmem:[%s404] sm:$0xff] %vm412, %v1920
        %s1922 = sand.u32 %s291, 1
        %s1923 = scalar_lea.sflag [#allocation3], %s1922
        %s1924 = sand.u32 %s291, 1
        %s1925 = smul.addr %s1924, 8
        %s1926 = scalar_lea.vmem [#allocation2], %s1925
        // Predicated region
        $region69: #{tpu_custom_call.1} parent=67 // pred_check
          %p1927 = pneg %p301
        $region70: #{tpu_custom_call.1} parent=67 // pred_check_branch
          %1929 = sbr.rel (%p1927) target = $region72
        $region71: #{tpu_custom_call.1} parent=67 // pred_region
          %s1931 = ssub.s32 128, 128
          %1932 = vsyncadd %s1923, %s1931
          %s1933 = smul.addr %s26, 128
          %s1934 = scalar_lea.hbm %s12, %s1933
          %s1936 = sshll.u32 %s1926, 4
          %s1937 = int_to_ptr.vmem [resolvable:$true] %s1936
          %1939 = dma.vmem_to_hbm [thread:$0]  %s1937, 128, %s1934, %s1923
        $region72: #{tpu_custom_call.1} parent=67 // pred_fallthru
          _
      $region68: #{tpu_custom_call.1} parent=5 // pred_fallthru
        _
      %p1940 = scmp.le.s32.totalorder 2, %s21
      // Predicated region
      $region73: #{tpu_custom_call.1} parent=5 // pred_check
        %p1941 = pneg %p1940
      $region74: #{tpu_custom_call.1} parent=5 // pred_check_branch
        %1943 = sbr.rel (%p1941) target = $region76
      $region75: #{tpu_custom_call.1} parent=5 // pred_region
        %s1944 = ssub.s32 %s21, 2
        // Predicated region
        $region77: #{tpu_custom_call.1} parent=75 // pred_check
          %p1945 = pneg %p307
        $region78: #{tpu_custom_call.1} parent=75 // pred_check_branch
          %1947 = sbr.rel (%p1945) target = $region80
        $region79: #{tpu_custom_call.1} parent=75 // pred_region
          %s1948 = sand.u32 %s292, 1
          %s1949 = scalar_lea.sflag [#allocation3], %s1948
          %s1950 = sand.u32 %s292, 1
          %s1951 = smul.addr %s1950, 8
          %s1952 = scalar_lea.vmem [#allocation2], %s1951
          %1953 = dma.done %s1949, 128
        $region80: #{tpu_custom_call.1} parent=75 // pred_fallthru
          _
      $region76: #{tpu_custom_call.1} parent=5 // pred_fallthru
        _
    $region6: #{tpu_custom_call.1} parent=1 // loop_footer
      %s25 = sadd.s32 1, %s21
    $region7: #{tpu_custom_call.1} parent=1 // loop_footer_branch
      %20 = sbr.rel target = $region3
    $region8: #{tpu_custom_call.1} parent=1 // loop_exit
      _
    %1954 = vsyncpa [#allocation3], 1
    %s1955 = scalar_lea.sflag [#allocation3], 1
    %1956 = vsyncpa %s1955, 1

</llo_original>
